<compile_context>
chip_gen: v7x
topology: tpu7x:2x2x1
jax: 0.10.0
libtpu: 0.0.40
codegen_flags: <defaults>
</compile_context>

<pallas_src>
import functools

import jax
import jax.numpy as jnp
from jax.experimental import pallas as pl
from jax.experimental.pallas import tpu as pltpu


# ----------------------------------- Pallas kernel ------------------------------------
def _lstm_recurrent_kernel(gx_ref, whh_t_ref, out_ref, h_ref, c_ref,
                           *, hidden_size, t_chunk):
    """One chunk of T_CHUNK timesteps of a single LSTM layer (grid axis 0 = time chunks).

    gx_ref:    (B, T_CHUNK, 4H) f32  -- precomputed x @ W_ih^T + bias for this chunk
    whh_t_ref: (H, 4H)               -- recurrent weight (constant across the grid)
    out_ref:   (B, T_CHUNK, H)       -- hidden states for this chunk
    h_ref/c_ref: (B, H) f32 VMEM scratch carried across grid steps
    """
    H = hidden_size

    @pl.when(pl.program_id(0) == 0)
    def _():
        h_ref[...] = jnp.zeros_like(h_ref)
        c_ref[...] = jnp.zeros_like(c_ref)

    whh_t = whh_t_ref[...]           # (H, 4H) stays resident for the whole chunk
    w_dtype = whh_t.dtype
    h = h_ref[...]                   # f32 carry
    c = c_ref[...]

    # Fully unrolled static loop over the chunk: static slices / stores are
    # lane- & sublane-aligned, and the LLO scheduler sees the whole chunk.
    for s in range(t_chunk):
        gates = gx_ref[:, s, :] + jnp.dot(h.astype(w_dtype), whh_t,
                                          preferred_element_type=jnp.float32)  # (B, 4H) f32
        # sigmoid(x) = 0.5*(tanh(0.5*x) + 1)  -- one EUP op per gate
        i_g = 0.5 * jnp.tanh(0.5 * gates[:, 0 * H:1 * H]) + 0.5
        f_g = 0.5 * jnp.tanh(0.5 * gates[:, 1 * H:2 * H]) + 0.5
        g_g = jnp.tanh(gates[:, 2 * H:3 * H])
        o_g = 0.5 * jnp.tanh(0.5 * gates[:, 3 * H:4 * H]) + 0.5

        c = f_g * c + i_g * g_g
        h = o_g * jnp.tanh(c)
        out_ref[:, s, :] = h.astype(out_ref.dtype)

    h_ref[...] = h
    c_ref[...] = c


# -------------------------------------- wrapper ---------------------------------------
def lstm_layer_pallas(x, w_ih, w_hh, b_ih, b_hh, *, t_chunk=8, io_dtype=jnp.float32):
    """One LSTM layer over the full sequence.

    x: (B, T, D_in);  w_ih: (4H, D_in);  w_hh: (4H, H);  b_ih/b_hh: (4H,)
    Returns out_seq (B, T, H) in io_dtype.
    """
    B, T, D = x.shape
    H = w_hh.shape[1]

    t_chunk = int(min(t_chunk, T))
    n_chunks = int(pl.cdiv(T, t_chunk))
    T_pad = n_chunks * t_chunk

    x = jnp.asarray(x, io_dtype)
    wih_t = jnp.asarray(w_ih, io_dtype).T            # (D, 4H)
    whh_t = jnp.asarray(w_hh, io_dtype).T            # (H, 4H)
    bias = jnp.asarray(b_ih, jnp.float32) + jnp.asarray(b_hh, jnp.float32)   # (4H,)

    # Hoisted input projection: one big batched matmul over every timestep (off the
    # serial critical path).  Accumulate / store in f32 for the gate pointwise math.
    gx = jnp.einsum('btd,dg->btg', x, wih_t,
                    preferred_element_type=jnp.float32) + bias               # (B, T, 4H)
    if T_pad != T:
        gx = jnp.pad(gx, ((0, 0), (0, T_pad - T), (0, 0)))

    kernel = functools.partial(_lstm_recurrent_kernel, hidden_size=H, t_chunk=t_chunk)

    out_seq = pl.pallas_call(
        kernel,
        grid=(n_chunks,),
        in_specs=[
            # gates_x, one time-chunk per grid step
            pl.BlockSpec((B, t_chunk, 4 * H), lambda c: (0, c, 0)),
            # W_hh^T: constant block (fetched once, stays resident)
            pl.BlockSpec((H, 4 * H), lambda c: (0, 0)),
        ],
        out_specs=pl.BlockSpec((B, t_chunk, H), lambda c: (0, c, 0)),
        out_shape=jax.ShapeDtypeStruct((B, T_pad, H), io_dtype),
        scratch_shapes=[
            pltpu.VMEM((B, H), jnp.float32),   # h carry
            pltpu.VMEM((B, H), jnp.float32),   # c carry
        ],
        compiler_params=pltpu.CompilerParams(
            dimension_semantics=("arbitrary",),          # sequential recurrence
            vmem_limit_bytes=64 * 1024 * 1024),
    )(gx, whh_t)

    return out_seq[:, :T, :] if T_pad != T else out_seq


def model_forward(x, lengths, layer_weights, *, t_chunk=8, io_dtype=jnp.float32):
    """Equivalent of Model.forward: multi-layer LSTM then gather data[i, lengths[i]-1].

    Returns (B, H) (the PyTorch code returns the same vectors as a list).
    """
    seq = jnp.asarray(x, io_dtype)
    for (w_ih, w_hh, b_ih, b_hh) in layer_weights:
        seq = lstm_layer_pallas(seq, w_ih, w_hh, b_ih, b_hh,
                                t_chunk=t_chunk, io_dtype=io_dtype)
    B, _, H = seq.shape
    idx = jnp.broadcast_to((jnp.asarray(lengths, jnp.int32) - 1)[:, None, None], (B, 1, H))
    return jnp.take_along_axis(seq, idx, axis=1)[:, 0, :]


# ----------------------- parameter init (deterministic, in-script) -----------------------
def init_lstm_params(key, input_size, hidden_size, num_layers):
    layers = []
    H = hidden_size
    for layer in range(num_layers):
        d_in = input_size if layer == 0 else hidden_size
        key, k1, k2, k3, k4 = jax.random.split(key, 5)
        if layer == 0:
            # matches nn.init.xavier_normal_ on all_weights[0][0] / [0][1]
            std_ih = (2.0 / (4 * H + d_in)) ** 0.5
            std_hh = (2.0 / (4 * H + H)) ** 0.5
            w_ih = std_ih * jax.random.normal(k1, (4 * H, d_in), jnp.float32)
            w_hh = std_hh * jax.random.normal(k2, (4 * H, H), jnp.float32)
        else:
            # PyTorch default LSTM init: U(-1/sqrt(H), 1/sqrt(H))
            bound = 1.0 / (H ** 0.5)
            w_ih = jax.random.uniform(k1, (4 * H, d_in), jnp.float32, -bound, bound)
            w_hh = jax.random.uniform(k2, (4 * H, H), jnp.float32, -bound, bound)
        bound = 1.0 / (H ** 0.5)
        b_ih = jax.random.uniform(k3, (4 * H,), jnp.float32, -bound, bound)
        b_hh = jax.random.uniform(k4, (4 * H,), jnp.float32, -bound, bound)
        layers.append((w_ih, w_hh, b_ih, b_hh))
    return layers


# ----------------------------- pure-JAX reference (for check) ----------------------------
def model_forward_ref(x, lengths, layer_weights):
    B, T, _ = x.shape
    inp = x
    for (w_ih, w_hh, b_ih, b_hh) in layer_weights:
        H = w_hh.shape[1]

        def step(carry, x_t, w_ih=w_ih, w_hh=w_hh, b_ih=b_ih, b_hh=b_hh, H=H):
            h, c = carry
            g = x_t @ w_ih.T + h @ w_hh.T + b_ih + b_hh
            i = jax.nn.sigmoid(g[:, 0 * H:1 * H])
            f = jax.nn.sigmoid(g[:, 1 * H:2 * H])
            gg = jnp.tanh(g[:, 2 * H:3 * H])
            o = jax.nn.sigmoid(g[:, 3 * H:4 * H])
            c = f * c + i * gg
            h = o * jnp.tanh(c)
            return (h, c), h

        carry0 = (jnp.zeros((B, H), jnp.float32), jnp.zeros((B, H), jnp.float32))
        _, outs = jax.lax.scan(step, carry0, jnp.swapaxes(inp, 0, 1))
        inp = jnp.swapaxes(outs, 0, 1)
    H = inp.shape[-1]
    idx = jnp.broadcast_to((lengths - 1)[:, None, None], (B, 1, H))
    return jnp.take_along_axis(inp, idx, axis=1)[:, 0, :]


if __name__ == "__main__":
    # config.model_params['LSTM_VEC'] stand-in (small synthetic sizes)
    INPUT_SIZE, HIDDEN_SIZE, NUM_LAYERS = 16, 32, 2
    B, T = 2, 16
    T_CHUNK = 8          # grid = (2,) so the h/c carry across grid steps is exercised

    key = jax.random.PRNGKey(0)
    key, kx = jax.random.split(key)
    x = jax.random.normal(kx, (B, T, INPUT_SIZE), jnp.float32)
    lengths = jnp.array([T, 11], jnp.int32)      # variable-length (packed) sequences

    params = init_lstm_params(key, INPUT_SIZE, HIDDEN_SIZE, NUM_LAYERS)

    # io_dtype=jnp.float32 for the tight correctness check; use jnp.bfloat16 at
    # production sizes to halve HBM/VMEM traffic and double MXU rate on v6e/v7x.
    x_vec = model_forward(x, lengths, params, t_chunk=T_CHUNK, io_dtype=jnp.float32)
    x_vec = jax.block_until_ready(x_vec)

    ref = model_forward_ref(x, lengths, params)
    assert x_vec.shape == (B, HIDDEN_SIZE)
    assert jnp.allclose(x_vec, ref, atol=2e-5, rtol=2e-5), "mismatch vs JAX reference"

    print("KERNEL_OK")
</pallas_src>

<mosaic_0001>
module attributes {stable_mosaic.version = 11 : i64} {
  func.func @_lstm_recurrent_kernel(%arg0: i32, %arg1: memref<2x8x128xf32, #tpu.memory_space<vmem>>, %arg2: memref<32x128xf32, #tpu.memory_space<vmem>>, %arg3: memref<2x8x32xf32, #tpu.memory_space<vmem>>, %arg4: memref<2x32xf32, #tpu.memory_space<vmem>>, %arg5: memref<2x32xf32, #tpu.memory_space<vmem>>) attributes {dimension_semantics = [#tpu.dimension_semantics<arbitrary>], iteration_bounds = array<i64: 2>, scalar_prefetch = 0 : i64, scratch_operands = 2 : i64, tpu.core_type = #tpu.core_type<tc>, window_params = [{transform_indices = @transform_0, window_bounds = array<i64: 2, 8, 128>}, {pipeline_mode = #tpu.pipeline_mode<synchronous>, transform_indices = @transform_1, window_bounds = array<i64: 32, 128>}, {transform_indices = @transform_2, window_bounds = array<i64: 2, 8, 32>}]} {
    %c0_i32 = arith.constant 0 : i32
    %0 = arith.cmpi eq, %arg0, %c0_i32 : i32
    %1 = arith.extui %0 : i1 to i32
    %c0_i32_0 = arith.constant 0 : i32
    %2 = arith.cmpi ne, %1, %c0_i32_0 : i32
    scf.if %2 {
      %cst_130 = arith.constant 0.000000e+00 : f32
      %312 = vector.broadcast %cst_130 : f32 to vector<2x32xf32>
      %c0_131 = arith.constant 0 : index
      %c0_132 = arith.constant 0 : index
      %313 = vector.load %arg4[%c0_131, %c0_132] : memref<2x32xf32, #tpu.memory_space<vmem>>, vector<2x32xf32>
      tpu.vector_store %arg4[%c0_131, %c0_132], %312 {strides = array<i32>} : memref<2x32xf32, #tpu.memory_space<vmem>>, vector<2x32xf32>,
      %cst_133 = arith.constant 0.000000e+00 : f32
      %314 = vector.broadcast %cst_133 : f32 to vector<2x32xf32>
      %c0_134 = arith.constant 0 : index
      %c0_135 = arith.constant 0 : index
      %315 = vector.load %arg5[%c0_134, %c0_135] : memref<2x32xf32, #tpu.memory_space<vmem>>, vector<2x32xf32>
      tpu.vector_store %arg5[%c0_134, %c0_135], %314 {strides = array<i32>} : memref<2x32xf32, #tpu.memory_space<vmem>>, vector<2x32xf32>,
    } else {
    }
    %c0 = arith.constant 0 : index
    %c0_1 = arith.constant 0 : index
    %3 = vector.load %arg2[%c0, %c0_1] : memref<32x128xf32, #tpu.memory_space<vmem>>, vector<32x128xf32>
    %c0_2 = arith.constant 0 : index
    %c0_3 = arith.constant 0 : index
    %4 = vector.load %arg4[%c0_2, %c0_3] : memref<2x32xf32, #tpu.memory_space<vmem>>, vector<2x32xf32>
    %c0_4 = arith.constant 0 : index
    %c0_5 = arith.constant 0 : index
    %5 = vector.load %arg5[%c0_4, %c0_5] : memref<2x32xf32, #tpu.memory_space<vmem>>, vector<2x32xf32>
    %c0_6 = arith.constant 0 : index
    %c0_7 = arith.constant 0 : index
    %c0_8 = arith.constant 0 : index
    %6 = vector.load %arg1[%c0_6, %c0_7, %c0_8] : memref<2x8x128xf32, #tpu.memory_space<vmem>>, vector<2x1x128xf32>
    %7 = vector.shape_cast %6 : vector<2x1x128xf32> to vector<2x128xf32>
    %cst = arith.constant dense<0.000000e+00> : vector<2x128xf32>
    %8 = tpu.matmul %4, %3, %cst {dimension_numbers = #tpu.dot_dimension_numbers<[1], [0], [0], [1], [0, 0, 1, 1], [], []>} : vector<2x32xf32>, vector<32x128xf32>, vector<2x128xf32> -> vector<2x128xf32>
    %9 = arith.addf %7, %8 : vector<2x128xf32>
    %10 = vector.extract_strided_slice %9 {offsets = [0, 0], sizes = [2, 32], strides = [1, 1]} : vector<2x128xf32> to vector<2x32xf32>
    %cst_9 = arith.constant 5.000000e-01 : f32
    %11 = vector.broadcast %cst_9 : f32 to vector<2x32xf32>
    %12 = arith.mulf %11, %10 : vector<2x32xf32>
    %13 = math.tanh %12 : vector<2x32xf32>
    %cst_10 = arith.constant 5.000000e-01 : f32
    %14 = vector.broadcast %cst_10 : f32 to vector<2x32xf32>
    %15 = arith.mulf %14, %13 : vector<2x32xf32>
    %cst_11 = arith.constant 5.000000e-01 : f32
    %16 = vector.broadcast %cst_11 : f32 to vector<2x32xf32>
    %17 = arith.addf %15, %16 : vector<2x32xf32>
    %18 = vector.extract_strided_slice %9 {offsets = [0, 32], sizes = [2, 32], strides = [1, 1]} : vector<2x128xf32> to vector<2x32xf32>
    %cst_12 = arith.constant 5.000000e-01 : f32
    %19 = vector.broadcast %cst_12 : f32 to vector<2x32xf32>
    %20 = arith.mulf %19, %18 : vector<2x32xf32>
    %21 = math.tanh %20 : vector<2x32xf32>
    %cst_13 = arith.constant 5.000000e-01 : f32
    %22 = vector.broadcast %cst_13 : f32 to vector<2x32xf32>
    %23 = arith.mulf %22, %21 : vector<2x32xf32>
    %cst_14 = arith.constant 5.000000e-01 : f32
    %24 = vector.broadcast %cst_14 : f32 to vector<2x32xf32>
    %25 = arith.addf %23, %24 : vector<2x32xf32>
    %26 = vector.extract_strided_slice %9 {offsets = [0, 64], sizes = [2, 32], strides = [1, 1]} : vector<2x128xf32> to vector<2x32xf32>
    %27 = math.tanh %26 : vector<2x32xf32>
    %28 = vector.extract_strided_slice %9 {offsets = [0, 96], sizes = [2, 32], strides = [1, 1]} : vector<2x128xf32> to vector<2x32xf32>
    %cst_15 = arith.constant 5.000000e-01 : f32
    %29 = vector.broadcast %cst_15 : f32 to vector<2x32xf32>
    %30 = arith.mulf %29, %28 : vector<2x32xf32>
    %31 = math.tanh %30 : vector<2x32xf32>
    %cst_16 = arith.constant 5.000000e-01 : f32
    %32 = vector.broadcast %cst_16 : f32 to vector<2x32xf32>
    %33 = arith.mulf %32, %31 : vector<2x32xf32>
    %cst_17 = arith.constant 5.000000e-01 : f32
    %34 = vector.broadcast %cst_17 : f32 to vector<2x32xf32>
    %35 = arith.addf %33, %34 : vector<2x32xf32>
    %36 = arith.mulf %25, %5 : vector<2x32xf32>
    %37 = arith.mulf %17, %27 : vector<2x32xf32>
    %38 = arith.addf %36, %37 : vector<2x32xf32>
    %39 = math.tanh %38 : vector<2x32xf32>
    %40 = arith.mulf %35, %39 : vector<2x32xf32>
    %c0_18 = arith.constant 0 : index
    %c0_19 = arith.constant 0 : index
    %c0_20 = arith.constant 0 : index
    %41 = vector.load %arg3[%c0_18, %c0_19, %c0_20] : memref<2x8x32xf32, #tpu.memory_space<vmem>>, vector<2x1x32xf32>
    %42 = vector.shape_cast %41 : vector<2x1x32xf32> to vector<2x32xf32>
    %43 = vector.shape_cast %40 : vector<2x32xf32> to vector<2x1x32xf32>
    tpu.vector_store %arg3[%c0_18, %c0_19, %c0_20], %43 {strides = array<i32>} : memref<2x8x32xf32, #tpu.memory_space<vmem>>, vector<2x1x32xf32>,
    %c0_21 = arith.constant 0 : index
    %c1 = arith.constant 1 : index
    %c0_22 = arith.constant 0 : index
    %44 = vector.load %arg1[%c0_21, %c1, %c0_22] : memref<2x8x128xf32, #tpu.memory_space<vmem>>, vector<2x1x128xf32>
    %45 = vector.shape_cast %44 : vector<2x1x128xf32> to vector<2x128xf32>
    %cst_23 = arith.constant dense<0.000000e+00> : vector<2x128xf32>
    %46 = tpu.matmul %40, %3, %cst_23 {dimension_numbers = #tpu.dot_dimension_numbers<[1], [0], [0], [1], [0, 0, 1, 1], [], []>} : vector<2x32xf32>, vector<32x128xf32>, vector<2x128xf32> -> vector<2x128xf32>
    %47 = arith.addf %45, %46 : vector<2x128xf32>
    %48 = vector.extract_strided_slice %47 {offsets = [0, 0], sizes = [2, 32], strides = [1, 1]} : vector<2x128xf32> to vector<2x32xf32>
    %cst_24 = arith.constant 5.000000e-01 : f32
    %49 = vector.broadcast %cst_24 : f32 to vector<2x32xf32>
    %50 = arith.mulf %49, %48 : vector<2x32xf32>
    %51 = math.tanh %50 : vector<2x32xf32>
    %cst_25 = arith.constant 5.000000e-01 : f32
    %52 = vector.broadcast %cst_25 : f32 to vector<2x32xf32>
    %53 = arith.mulf %52, %51 : vector<2x32xf32>
    %cst_26 = arith.constant 5.000000e-01 : f32
    %54 = vector.broadcast %cst_26 : f32 to vector<2x32xf32>
    %55 = arith.addf %53, %54 : vector<2x32xf32>
    %56 = vector.extract_strided_slice %47 {offsets = [0, 32], sizes = [2, 32], strides = [1, 1]} : vector<2x128xf32> to vector<2x32xf32>
    %cst_27 = arith.constant 5.000000e-01 : f32
    %57 = vector.broadcast %cst_27 : f32 to vector<2x32xf32>
    %58 = arith.mulf %57, %56 : vector<2x32xf32>
    %59 = math.tanh %58 : vector<2x32xf32>
    %cst_28 = arith.constant 5.000000e-01 : f32
    %60 = vector.broadcast %cst_28 : f32 to vector<2x32xf32>
    %61 = arith.mulf %60, %59 : vector<2x32xf32>
    %cst_29 = arith.constant 5.000000e-01 : f32
    %62 = vector.broadcast %cst_29 : f32 to vector<2x32xf32>
    %63 = arith.addf %61, %62 : vector<2x32xf32>
    %64 = vector.extract_strided_slice %47 {offsets = [0, 64], sizes = [2, 32], strides = [1, 1]} : vector<2x128xf32> to vector<2x32xf32>
    %65 = math.tanh %64 : vector<2x32xf32>
    %66 = vector.extract_strided_slice %47 {offsets = [0, 96], sizes = [2, 32], strides = [1, 1]} : vector<2x128xf32> to vector<2x32xf32>
    %cst_30 = arith.constant 5.000000e-01 : f32
    %67 = vector.broadcast %cst_30 : f32 to vector<2x32xf32>
    %68 = arith.mulf %67, %66 : vector<2x32xf32>
    %69 = math.tanh %68 : vector<2x32xf32>
    %cst_31 = arith.constant 5.000000e-01 : f32
    %70 = vector.broadcast %cst_31 : f32 to vector<2x32xf32>
    %71 = arith.mulf %70, %69 : vector<2x32xf32>
    %cst_32 = arith.constant 5.000000e-01 : f32
    %72 = vector.broadcast %cst_32 : f32 to vector<2x32xf32>
    %73 = arith.addf %71, %72 : vector<2x32xf32>
    %74 = arith.mulf %63, %38 : vector<2x32xf32>
    %75 = arith.mulf %55, %65 : vector<2x32xf32>
    %76 = arith.addf %74, %75 : vector<2x32xf32>
    %77 = math.tanh %76 : vector<2x32xf32>
    %78 = arith.mulf %73, %77 : vector<2x32xf32>
    %c0_33 = arith.constant 0 : index
    %c1_34 = arith.constant 1 : index
    %c0_35 = arith.constant 0 : index
    %79 = vector.load %arg3[%c0_33, %c1_34, %c0_35] : memref<2x8x32xf32, #tpu.memory_space<vmem>>, vector<2x1x32xf32>
    %80 = vector.shape_cast %79 : vector<2x1x32xf32> to vector<2x32xf32>
    %81 = vector.shape_cast %78 : vector<2x32xf32> to vector<2x1x32xf32>
    tpu.vector_store %arg3[%c0_33, %c1_34, %c0_35], %81 {strides = array<i32>} : memref<2x8x32xf32, #tpu.memory_space<vmem>>, vector<2x1x32xf32>,
    %c0_36 = arith.constant 0 : index
    %c2 = arith.constant 2 : index
    %c0_37 = arith.constant 0 : index
    %82 = vector.load %arg1[%c0_36, %c2, %c0_37] : memref<2x8x128xf32, #tpu.memory_space<vmem>>, vector<2x1x128xf32>
    %83 = vector.shape_cast %82 : vector<2x1x128xf32> to vector<2x128xf32>
    %cst_38 = arith.constant dense<0.000000e+00> : vector<2x128xf32>
    %84 = tpu.matmul %78, %3, %cst_38 {dimension_numbers = #tpu.dot_dimension_numbers<[1], [0], [0], [1], [0, 0, 1, 1], [], []>} : vector<2x32xf32>, vector<32x128xf32>, vector<2x128xf32> -> vector<2x128xf32>
    %85 = arith.addf %83, %84 : vector<2x128xf32>
    %86 = vector.extract_strided_slice %85 {offsets = [0, 0], sizes = [2, 32], strides = [1, 1]} : vector<2x128xf32> to vector<2x32xf32>
    %cst_39 = arith.constant 5.000000e-01 : f32
    %87 = vector.broadcast %cst_39 : f32 to vector<2x32xf32>
    %88 = arith.mulf %87, %86 : vector<2x32xf32>
    %89 = math.tanh %88 : vector<2x32xf32>
    %cst_40 = arith.constant 5.000000e-01 : f32
    %90 = vector.broadcast %cst_40 : f32 to vector<2x32xf32>
    %91 = arith.mulf %90, %89 : vector<2x32xf32>
    %cst_41 = arith.constant 5.000000e-01 : f32
    %92 = vector.broadcast %cst_41 : f32 to vector<2x32xf32>
    %93 = arith.addf %91, %92 : vector<2x32xf32>
    %94 = vector.extract_strided_slice %85 {offsets = [0, 32], sizes = [2, 32], strides = [1, 1]} : vector<2x128xf32> to vector<2x32xf32>
    %cst_42 = arith.constant 5.000000e-01 : f32
    %95 = vector.broadcast %cst_42 : f32 to vector<2x32xf32>
    %96 = arith.mulf %95, %94 : vector<2x32xf32>
    %97 = math.tanh %96 : vector<2x32xf32>
    %cst_43 = arith.constant 5.000000e-01 : f32
    %98 = vector.broadcast %cst_43 : f32 to vector<2x32xf32>
    %99 = arith.mulf %98, %97 : vector<2x32xf32>
    %cst_44 = arith.constant 5.000000e-01 : f32
    %100 = vector.broadcast %cst_44 : f32 to vector<2x32xf32>
    %101 = arith.addf %99, %100 : vector<2x32xf32>
    %102 = vector.extract_strided_slice %85 {offsets = [0, 64], sizes = [2, 32], strides = [1, 1]} : vector<2x128xf32> to vector<2x32xf32>
    %103 = math.tanh %102 : vector<2x32xf32>
    %104 = vector.extract_strided_slice %85 {offsets = [0, 96], sizes = [2, 32], strides = [1, 1]} : vector<2x128xf32> to vector<2x32xf32>
    %cst_45 = arith.constant 5.000000e-01 : f32
    %105 = vector.broadcast %cst_45 : f32 to vector<2x32xf32>
    %106 = arith.mulf %105, %104 : vector<2x32xf32>
    %107 = math.tanh %106 : vector<2x32xf32>
    %cst_46 = arith.constant 5.000000e-01 : f32
    %108 = vector.broadcast %cst_46 : f32 to vector<2x32xf32>
    %109 = arith.mulf %108, %107 : vector<2x32xf32>
    %cst_47 = arith.constant 5.000000e-01 : f32
    %110 = vector.broadcast %cst_47 : f32 to vector<2x32xf32>
    %111 = arith.addf %109, %110 : vector<2x32xf32>
    %112 = arith.mulf %101, %76 : vector<2x32xf32>
    %113 = arith.mulf %93, %103 : vector<2x32xf32>
    %114 = arith.addf %112, %113 : vector<2x32xf32>
    %115 = math.tanh %114 : vector<2x32xf32>
    %116 = arith.mulf %111, %115 : vector<2x32xf32>
    %c0_48 = arith.constant 0 : index
    %c2_49 = arith.constant 2 : index
    %c0_50 = arith.constant 0 : index
    %117 = vector.load %arg3[%c0_48, %c2_49, %c0_50] : memref<2x8x32xf32, #tpu.memory_space<vmem>>, vector<2x1x32xf32>
    %118 = vector.shape_cast %117 : vector<2x1x32xf32> to vector<2x32xf32>
    %119 = vector.shape_cast %116 : vector<2x32xf32> to vector<2x1x32xf32>
    tpu.vector_store %arg3[%c0_48, %c2_49, %c0_50], %119 {strides = array<i32>} : memref<2x8x32xf32, #tpu.memory_space<vmem>>, vector<2x1x32xf32>,
    %c0_51 = arith.constant 0 : index
    %c3 = arith.constant 3 : index
    %c0_52 = arith.constant 0 : index
    %120 = vector.load %arg1[%c0_51, %c3, %c0_52] : memref<2x8x128xf32, #tpu.memory_space<vmem>>, vector<2x1x128xf32>
    %121 = vector.shape_cast %120 : vector<2x1x128xf32> to vector<2x128xf32>
    %cst_53 = arith.constant dense<0.000000e+00> : vector<2x128xf32>
    %122 = tpu.matmul %116, %3, %cst_53 {dimension_numbers = #tpu.dot_dimension_numbers<[1], [0], [0], [1], [0, 0, 1, 1], [], []>} : vector<2x32xf32>, vector<32x128xf32>, vector<2x128xf32> -> vector<2x128xf32>
    %123 = arith.addf %121, %122 : vector<2x128xf32>
    %124 = vector.extract_strided_slice %123 {offsets = [0, 0], sizes = [2, 32], strides = [1, 1]} : vector<2x128xf32> to vector<2x32xf32>
    %cst_54 = arith.constant 5.000000e-01 : f32
    %125 = vector.broadcast %cst_54 : f32 to vector<2x32xf32>
    %126 = arith.mulf %125, %124 : vector<2x32xf32>
    %127 = math.tanh %126 : vector<2x32xf32>
    %cst_55 = arith.constant 5.000000e-01 : f32
    %128 = vector.broadcast %cst_55 : f32 to vector<2x32xf32>
    %129 = arith.mulf %128, %127 : vector<2x32xf32>
    %cst_56 = arith.constant 5.000000e-01 : f32
    %130 = vector.broadcast %cst_56 : f32 to vector<2x32xf32>
    %131 = arith.addf %129, %130 : vector<2x32xf32>
    %132 = vector.extract_strided_slice %123 {offsets = [0, 32], sizes = [2, 32], strides = [1, 1]} : vector<2x128xf32> to vector<2x32xf32>
    %cst_57 = arith.constant 5.000000e-01 : f32
    %133 = vector.broadcast %cst_57 : f32 to vector<2x32xf32>
    %134 = arith.mulf %133, %132 : vector<2x32xf32>
    %135 = math.tanh %134 : vector<2x32xf32>
    %cst_58 = arith.constant 5.000000e-01 : f32
    %136 = vector.broadcast %cst_58 : f32 to vector<2x32xf32>
    %137 = arith.mulf %136, %135 : vector<2x32xf32>
    %cst_59 = arith.constant 5.000000e-01 : f32
    %138 = vector.broadcast %cst_59 : f32 to vector<2x32xf32>
    %139 = arith.addf %137, %138 : vector<2x32xf32>
    %140 = vector.extract_strided_slice %123 {offsets = [0, 64], sizes = [2, 32], strides = [1, 1]} : vector<2x128xf32> to vector<2x32xf32>
    %141 = math.tanh %140 : vector<2x32xf32>
    %142 = vector.extract_strided_slice %123 {offsets = [0, 96], sizes = [2, 32], strides = [1, 1]} : vector<2x128xf32> to vector<2x32xf32>
    %cst_60 = arith.constant 5.000000e-01 : f32
    %143 = vector.broadcast %cst_60 : f32 to vector<2x32xf32>
    %144 = arith.mulf %143, %142 : vector<2x32xf32>
    %145 = math.tanh %144 : vector<2x32xf32>
    %cst_61 = arith.constant 5.000000e-01 : f32
    %146 = vector.broadcast %cst_61 : f32 to vector<2x32xf32>
    %147 = arith.mulf %146, %145 : vector<2x32xf32>
    %cst_62 = arith.constant 5.000000e-01 : f32
    %148 = vector.broadcast %cst_62 : f32 to vector<2x32xf32>
    %149 = arith.addf %147, %148 : vector<2x32xf32>
    %150 = arith.mulf %139, %114 : vector<2x32xf32>
    %151 = arith.mulf %131, %141 : vector<2x32xf32>
    %152 = arith.addf %150, %151 : vector<2x32xf32>
    %153 = math.tanh %152 : vector<2x32xf32>
    %154 = arith.mulf %149, %153 : vector<2x32xf32>
    %c0_63 = arith.constant 0 : index
    %c3_64 = arith.constant 3 : index
    %c0_65 = arith.constant 0 : index
    %155 = vector.load %arg3[%c0_63, %c3_64, %c0_65] : memref<2x8x32xf32, #tpu.memory_space<vmem>>, vector<2x1x32xf32>
    %156 = vector.shape_cast %155 : vector<2x1x32xf32> to vector<2x32xf32>
    %157 = vector.shape_cast %154 : vector<2x32xf32> to vector<2x1x32xf32>
    tpu.vector_store %arg3[%c0_63, %c3_64, %c0_65], %157 {strides = array<i32>} : memref<2x8x32xf32, #tpu.memory_space<vmem>>, vector<2x1x32xf32>,
    %c0_66 = arith.constant 0 : index
    %c4 = arith.constant 4 : index
    %c0_67 = arith.constant 0 : index
    %158 = vector.load %arg1[%c0_66, %c4, %c0_67] : memref<2x8x128xf32, #tpu.memory_space<vmem>>, vector<2x1x128xf32>
    %159 = vector.shape_cast %158 : vector<2x1x128xf32> to vector<2x128xf32>
    %cst_68 = arith.constant dense<0.000000e+00> : vector<2x128xf32>
    %160 = tpu.matmul %154, %3, %cst_68 {dimension_numbers = #tpu.dot_dimension_numbers<[1], [0], [0], [1], [0, 0, 1, 1], [], []>} : vector<2x32xf32>, vector<32x128xf32>, vector<2x128xf32> -> vector<2x128xf32>
    %161 = arith.addf %159, %160 : vector<2x128xf32>
    %162 = vector.extract_strided_slice %161 {offsets = [0, 0], sizes = [2, 32], strides = [1, 1]} : vector<2x128xf32> to vector<2x32xf32>
    %cst_69 = arith.constant 5.000000e-01 : f32
    %163 = vector.broadcast %cst_69 : f32 to vector<2x32xf32>
    %164 = arith.mulf %163, %162 : vector<2x32xf32>
    %165 = math.tanh %164 : vector<2x32xf32>
    %cst_70 = arith.constant 5.000000e-01 : f32
    %166 = vector.broadcast %cst_70 : f32 to vector<2x32xf32>
    %167 = arith.mulf %166, %165 : vector<2x32xf32>
    %cst_71 = arith.constant 5.000000e-01 : f32
    %168 = vector.broadcast %cst_71 : f32 to vector<2x32xf32>
    %169 = arith.addf %167, %168 : vector<2x32xf32>
    %170 = vector.extract_strided_slice %161 {offsets = [0, 32], sizes = [2, 32], strides = [1, 1]} : vector<2x128xf32> to vector<2x32xf32>
    %cst_72 = arith.constant 5.000000e-01 : f32
    %171 = vector.broadcast %cst_72 : f32 to vector<2x32xf32>
    %172 = arith.mulf %171, %170 : vector<2x32xf32>
    %173 = math.tanh %172 : vector<2x32xf32>
    %cst_73 = arith.constant 5.000000e-01 : f32
    %174 = vector.broadcast %cst_73 : f32 to vector<2x32xf32>
    %175 = arith.mulf %174, %173 : vector<2x32xf32>
    %cst_74 = arith.constant 5.000000e-01 : f32
    %176 = vector.broadcast %cst_74 : f32 to vector<2x32xf32>
    %177 = arith.addf %175, %176 : vector<2x32xf32>
    %178 = vector.extract_strided_slice %161 {offsets = [0, 64], sizes = [2, 32], strides = [1, 1]} : vector<2x128xf32> to vector<2x32xf32>
    %179 = math.tanh %178 : vector<2x32xf32>
    %180 = vector.extract_strided_slice %161 {offsets = [0, 96], sizes = [2, 32], strides = [1, 1]} : vector<2x128xf32> to vector<2x32xf32>
    %cst_75 = arith.constant 5.000000e-01 : f32
    %181 = vector.broadcast %cst_75 : f32 to vector<2x32xf32>
    %182 = arith.mulf %181, %180 : vector<2x32xf32>
    %183 = math.tanh %182 : vector<2x32xf32>
    %cst_76 = arith.constant 5.000000e-01 : f32
    %184 = vector.broadcast %cst_76 : f32 to vector<2x32xf32>
    %185 = arith.mulf %184, %183 : vector<2x32xf32>
    %cst_77 = arith.constant 5.000000e-01 : f32
    %186 = vector.broadcast %cst_77 : f32 to vector<2x32xf32>
    %187 = arith.addf %185, %186 : vector<2x32xf32>
    %188 = arith.mulf %177, %152 : vector<2x32xf32>
    %189 = arith.mulf %169, %179 : vector<2x32xf32>
    %190 = arith.addf %188, %189 : vector<2x32xf32>
    %191 = math.tanh %190 : vector<2x32xf32>
    %192 = arith.mulf %187, %191 : vector<2x32xf32>
    %c0_78 = arith.constant 0 : index
    %c4_79 = arith.constant 4 : index
    %c0_80 = arith.constant 0 : index
    %193 = vector.load %arg3[%c0_78, %c4_79, %c0_80] : memref<2x8x32xf32, #tpu.memory_space<vmem>>, vector<2x1x32xf32>
    %194 = vector.shape_cast %193 : vector<2x1x32xf32> to vector<2x32xf32>
    %195 = vector.shape_cast %192 : vector<2x32xf32> to vector<2x1x32xf32>
    tpu.vector_store %arg3[%c0_78, %c4_79, %c0_80], %195 {strides = array<i32>} : memref<2x8x32xf32, #tpu.memory_space<vmem>>, vector<2x1x32xf32>,
    %c0_81 = arith.constant 0 : index
    %c5 = arith.constant 5 : index
    %c0_82 = arith.constant 0 : index
    %196 = vector.load %arg1[%c0_81, %c5, %c0_82] : memref<2x8x128xf32, #tpu.memory_space<vmem>>, vector<2x1x128xf32>
    %197 = vector.shape_cast %196 : vector<2x1x128xf32> to vector<2x128xf32>
    %cst_83 = arith.constant dense<0.000000e+00> : vector<2x128xf32>
    %198 = tpu.matmul %192, %3, %cst_83 {dimension_numbers = #tpu.dot_dimension_numbers<[1], [0], [0], [1], [0, 0, 1, 1], [], []>} : vector<2x32xf32>, vector<32x128xf32>, vector<2x128xf32> -> vector<2x128xf32>
    %199 = arith.addf %197, %198 : vector<2x128xf32>
    %200 = vector.extract_strided_slice %199 {offsets = [0, 0], sizes = [2, 32], strides = [1, 1]} : vector<2x128xf32> to vector<2x32xf32>
    %cst_84 = arith.constant 5.000000e-01 : f32
    %201 = vector.broadcast %cst_84 : f32 to vector<2x32xf32>
    %202 = arith.mulf %201, %200 : vector<2x32xf32>
    %203 = math.tanh %202 : vector<2x32xf32>
    %cst_85 = arith.constant 5.000000e-01 : f32
    %204 = vector.broadcast %cst_85 : f32 to vector<2x32xf32>
    %205 = arith.mulf %204, %203 : vector<2x32xf32>
    %cst_86 = arith.constant 5.000000e-01 : f32
    %206 = vector.broadcast %cst_86 : f32 to vector<2x32xf32>
    %207 = arith.addf %205, %206 : vector<2x32xf32>
    %208 = vector.extract_strided_slice %199 {offsets = [0, 32], sizes = [2, 32], strides = [1, 1]} : vector<2x128xf32> to vector<2x32xf32>
    %cst_87 = arith.constant 5.000000e-01 : f32
    %209 = vector.broadcast %cst_87 : f32 to vector<2x32xf32>
    %210 = arith.mulf %209, %208 : vector<2x32xf32>
    %211 = math.tanh %210 : vector<2x32xf32>
    %cst_88 = arith.constant 5.000000e-01 : f32
    %212 = vector.broadcast %cst_88 : f32 to vector<2x32xf32>
    %213 = arith.mulf %212, %211 : vector<2x32xf32>
    %cst_89 = arith.constant 5.000000e-01 : f32
    %214 = vector.broadcast %cst_89 : f32 to vector<2x32xf32>
    %215 = arith.addf %213, %214 : vector<2x32xf32>
    %216 = vector.extract_strided_slice %199 {offsets = [0, 64], sizes = [2, 32], strides = [1, 1]} : vector<2x128xf32> to vector<2x32xf32>
    %217 = math.tanh %216 : vector<2x32xf32>
    %218 = vector.extract_strided_slice %199 {offsets = [0, 96], sizes = [2, 32], strides = [1, 1]} : vector<2x128xf32> to vector<2x32xf32>
    %cst_90 = arith.constant 5.000000e-01 : f32
    %219 = vector.broadcast %cst_90 : f32 to vector<2x32xf32>
    %220 = arith.mulf %219, %218 : vector<2x32xf32>
    %221 = math.tanh %220 : vector<2x32xf32>
    %cst_91 = arith.constant 5.000000e-01 : f32
    %222 = vector.broadcast %cst_91 : f32 to vector<2x32xf32>
    %223 = arith.mulf %222, %221 : vector<2x32xf32>
    %cst_92 = arith.constant 5.000000e-01 : f32
    %224 = vector.broadcast %cst_92 : f32 to vector<2x32xf32>
    %225 = arith.addf %223, %224 : vector<2x32xf32>
    %226 = arith.mulf %215, %190 : vector<2x32xf32>
    %227 = arith.mulf %207, %217 : vector<2x32xf32>
    %228 = arith.addf %226, %227 : vector<2x32xf32>
    %229 = math.tanh %228 : vector<2x32xf32>
    %230 = arith.mulf %225, %229 : vector<2x32xf32>
    %c0_93 = arith.constant 0 : index
    %c5_94 = arith.constant 5 : index
    %c0_95 = arith.constant 0 : index
    %231 = vector.load %arg3[%c0_93, %c5_94, %c0_95] : memref<2x8x32xf32, #tpu.memory_space<vmem>>, vector<2x1x32xf32>
    %232 = vector.shape_cast %231 : vector<2x1x32xf32> to vector<2x32xf32>
    %233 = vector.shape_cast %230 : vector<2x32xf32> to vector<2x1x32xf32>
    tpu.vector_store %arg3[%c0_93, %c5_94, %c0_95], %233 {strides = array<i32>} : memref<2x8x32xf32, #tpu.memory_space<vmem>>, vector<2x1x32xf32>,
    %c0_96 = arith.constant 0 : index
    %c6 = arith.constant 6 : index
    %c0_97 = arith.constant 0 : index
    %234 = vector.load %arg1[%c0_96, %c6, %c0_97] : memref<2x8x128xf32, #tpu.memory_space<vmem>>, vector<2x1x128xf32>
    %235 = vector.shape_cast %234 : vector<2x1x128xf32> to vector<2x128xf32>
    %cst_98 = arith.constant dense<0.000000e+00> : vector<2x128xf32>
    %236 = tpu.matmul %230, %3, %cst_98 {dimension_numbers = #tpu.dot_dimension_numbers<[1], [0], [0], [1], [0, 0, 1, 1], [], []>} : vector<2x32xf32>, vector<32x128xf32>, vector<2x128xf32> -> vector<2x128xf32>
    %237 = arith.addf %235, %236 : vector<2x128xf32>
    %238 = vector.extract_strided_slice %237 {offsets = [0, 0], sizes = [2, 32], strides = [1, 1]} : vector<2x128xf32> to vector<2x32xf32>
    %cst_99 = arith.constant 5.000000e-01 : f32
    %239 = vector.broadcast %cst_99 : f32 to vector<2x32xf32>
    %240 = arith.mulf %239, %238 : vector<2x32xf32>
    %241 = math.tanh %240 : vector<2x32xf32>
    %cst_100 = arith.constant 5.000000e-01 : f32
    %242 = vector.broadcast %cst_100 : f32 to vector<2x32xf32>
    %243 = arith.mulf %242, %241 : vector<2x32xf32>
    %cst_101 = arith.constant 5.000000e-01 : f32
    %244 = vector.broadcast %cst_101 : f32 to vector<2x32xf32>
    %245 = arith.addf %243, %244 : vector<2x32xf32>
    %246 = vector.extract_strided_slice %237 {offsets = [0, 32], sizes = [2, 32], strides = [1, 1]} : vector<2x128xf32> to vector<2x32xf32>
    %cst_102 = arith.constant 5.000000e-01 : f32
    %247 = vector.broadcast %cst_102 : f32 to vector<2x32xf32>
    %248 = arith.mulf %247, %246 : vector<2x32xf32>
    %249 = math.tanh %248 : vector<2x32xf32>
    %cst_103 = arith.constant 5.000000e-01 : f32
    %250 = vector.broadcast %cst_103 : f32 to vector<2x32xf32>
    %251 = arith.mulf %250, %249 : vector<2x32xf32>
    %cst_104 = arith.constant 5.000000e-01 : f32
    %252 = vector.broadcast %cst_104 : f32 to vector<2x32xf32>
    %253 = arith.addf %251, %252 : vector<2x32xf32>
    %254 = vector.extract_strided_slice %237 {offsets = [0, 64], sizes = [2, 32], strides = [1, 1]} : vector<2x128xf32> to vector<2x32xf32>
    %255 = math.tanh %254 : vector<2x32xf32>
    %256 = vector.extract_strided_slice %237 {offsets = [0, 96], sizes = [2, 32], strides = [1, 1]} : vector<2x128xf32> to vector<2x32xf32>
    %cst_105 = arith.constant 5.000000e-01 : f32
    %257 = vector.broadcast %cst_105 : f32 to vector<2x32xf32>
    %258 = arith.mulf %257, %256 : vector<2x32xf32>
    %259 = math.tanh %258 : vector<2x32xf32>
    %cst_106 = arith.constant 5.000000e-01 : f32
    %260 = vector.broadcast %cst_106 : f32 to vector<2x32xf32>
    %261 = arith.mulf %260, %259 : vector<2x32xf32>
    %cst_107 = arith.constant 5.000000e-01 : f32
    %262 = vector.broadcast %cst_107 : f32 to vector<2x32xf32>
    %263 = arith.addf %261, %262 : vector<2x32xf32>
    %264 = arith.mulf %253, %228 : vector<2x32xf32>
    %265 = arith.mulf %245, %255 : vector<2x32xf32>
    %266 = arith.addf %264, %265 : vector<2x32xf32>
    %267 = math.tanh %266 : vector<2x32xf32>
    %268 = arith.mulf %263, %267 : vector<2x32xf32>
    %c0_108 = arith.constant 0 : index
    %c6_109 = arith.constant 6 : index
    %c0_110 = arith.constant 0 : index
    %269 = vector.load %arg3[%c0_108, %c6_109, %c0_110] : memref<2x8x32xf32, #tpu.memory_space<vmem>>, vector<2x1x32xf32>
    %270 = vector.shape_cast %269 : vector<2x1x32xf32> to vector<2x32xf32>
    %271 = vector.shape_cast %268 : vector<2x32xf32> to vector<2x1x32xf32>
    tpu.vector_store %arg3[%c0_108, %c6_109, %c0_110], %271 {strides = array<i32>} : memref<2x8x32xf32, #tpu.memory_space<vmem>>, vector<2x1x32xf32>,
    %c0_111 = arith.constant 0 : index
    %c7 = arith.constant 7 : index
    %c0_112 = arith.constant 0 : index
    %272 = vector.load %arg1[%c0_111, %c7, %c0_112] : memref<2x8x128xf32, #tpu.memory_space<vmem>>, vector<2x1x128xf32>
    %273 = vector.shape_cast %272 : vector<2x1x128xf32> to vector<2x128xf32>
    %cst_113 = arith.constant dense<0.000000e+00> : vector<2x128xf32>
    %274 = tpu.matmul %268, %3, %cst_113 {dimension_numbers = #tpu.dot_dimension_numbers<[1], [0], [0], [1], [0, 0, 1, 1], [], []>} : vector<2x32xf32>, vector<32x128xf32>, vector<2x128xf32> -> vector<2x128xf32>
    %275 = arith.addf %273, %274 : vector<2x128xf32>
    %276 = vector.extract_strided_slice %275 {offsets = [0, 0], sizes = [2, 32], strides = [1, 1]} : vector<2x128xf32> to vector<2x32xf32>
    %cst_114 = arith.constant 5.000000e-01 : f32
    %277 = vector.broadcast %cst_114 : f32 to vector<2x32xf32>
    %278 = arith.mulf %277, %276 : vector<2x32xf32>
    %279 = math.tanh %278 : vector<2x32xf32>
    %cst_115 = arith.constant 5.000000e-01 : f32
    %280 = vector.broadcast %cst_115 : f32 to vector<2x32xf32>
    %281 = arith.mulf %280, %279 : vector<2x32xf32>
    %cst_116 = arith.constant 5.000000e-01 : f32
    %282 = vector.broadcast %cst_116 : f32 to vector<2x32xf32>
    %283 = arith.addf %281, %282 : vector<2x32xf32>
    %284 = vector.extract_strided_slice %275 {offsets = [0, 32], sizes = [2, 32], strides = [1, 1]} : vector<2x128xf32> to vector<2x32xf32>
    %cst_117 = arith.constant 5.000000e-01 : f32
    %285 = vector.broadcast %cst_117 : f32 to vector<2x32xf32>
    %286 = arith.mulf %285, %284 : vector<2x32xf32>
    %287 = math.tanh %286 : vector<2x32xf32>
    %cst_118 = arith.constant 5.000000e-01 : f32
    %288 = vector.broadcast %cst_118 : f32 to vector<2x32xf32>
    %289 = arith.mulf %288, %287 : vector<2x32xf32>
    %cst_119 = arith.constant 5.000000e-01 : f32
    %290 = vector.broadcast %cst_119 : f32 to vector<2x32xf32>
    %291 = arith.addf %289, %290 : vector<2x32xf32>
    %292 = vector.extract_strided_slice %275 {offsets = [0, 64], sizes = [2, 32], strides = [1, 1]} : vector<2x128xf32> to vector<2x32xf32>
    %293 = math.tanh %292 : vector<2x32xf32>
    %294 = vector.extract_strided_slice %275 {offsets = [0, 96], sizes = [2, 32], strides = [1, 1]} : vector<2x128xf32> to vector<2x32xf32>
    %cst_120 = arith.constant 5.000000e-01 : f32
    %295 = vector.broadcast %cst_120 : f32 to vector<2x32xf32>
    %296 = arith.mulf %295, %294 : vector<2x32xf32>
    %297 = math.tanh %296 : vector<2x32xf32>
    %cst_121 = arith.constant 5.000000e-01 : f32
    %298 = vector.broadcast %cst_121 : f32 to vector<2x32xf32>
    %299 = arith.mulf %298, %297 : vector<2x32xf32>
    %cst_122 = arith.constant 5.000000e-01 : f32
    %300 = vector.broadcast %cst_122 : f32 to vector<2x32xf32>
    %301 = arith.addf %299, %300 : vector<2x32xf32>
    %302 = arith.mulf %291, %266 : vector<2x32xf32>
    %303 = arith.mulf %283, %293 : vector<2x32xf32>
    %304 = arith.addf %302, %303 : vector<2x32xf32>
    %305 = math.tanh %304 : vector<2x32xf32>
    %306 = arith.mulf %301, %305 : vector<2x32xf32>
    %c0_123 = arith.constant 0 : index
    %c7_124 = arith.constant 7 : index
    %c0_125 = arith.constant 0 : index
    %307 = vector.load %arg3[%c0_123, %c7_124, %c0_125] : memref<2x8x32xf32, #tpu.memory_space<vmem>>, vector<2x1x32xf32>
    %308 = vector.shape_cast %307 : vector<2x1x32xf32> to vector<2x32xf32>
    %309 = vector.shape_cast %306 : vector<2x32xf32> to vector<2x1x32xf32>
    tpu.vector_store %arg3[%c0_123, %c7_124, %c0_125], %309 {strides = array<i32>} : memref<2x8x32xf32, #tpu.memory_space<vmem>>, vector<2x1x32xf32>,
    %c0_126 = arith.constant 0 : index
    %c0_127 = arith.constant 0 : index
    %310 = vector.load %arg4[%c0_126, %c0_127] : memref<2x32xf32, #tpu.memory_space<vmem>>, vector<2x32xf32>
    tpu.vector_store %arg4[%c0_126, %c0_127], %306 {strides = array<i32>} : memref<2x32xf32, #tpu.memory_space<vmem>>, vector<2x32xf32>,
    %c0_128 = arith.constant 0 : index
    %c0_129 = arith.constant 0 : index
    %311 = vector.load %arg5[%c0_128, %c0_129] : memref<2x32xf32, #tpu.memory_space<vmem>>, vector<2x32xf32>
    tpu.vector_store %arg5[%c0_128, %c0_129], %304 {strides = array<i32>} : memref<2x32xf32, #tpu.memory_space<vmem>>, vector<2x32xf32>,
    return
  }
  func.func @transform_0(%arg0: i32) -> (i32, i32, i32) {
    %c0_i32 = arith.constant 0 : i32
    %c0_i32_0 = arith.constant 0 : i32
    %c0_i32_1 = arith.constant 0 : i32
    return %c0_i32, %arg0, %c0_i32_0 : i32, i32, i32
  }
  func.func @transform_1(%arg0: i32) -> (i32, i32) {
    %c0_i32 = arith.constant 0 : i32
    %c0_i32_0 = arith.constant 0 : i32
    %c0_i32_1 = arith.constant 0 : i32
    return %c0_i32, %c0_i32_0 : i32, i32
  }
  func.func @transform_2(%arg0: i32) -> (i32, i32, i32) {
    %c0_i32 = arith.constant 0 : i32
    %c0_i32_0 = arith.constant 0 : i32
    %c0_i32_1 = arith.constant 0 : i32
    return %c0_i32, %arg0, %c0_i32_0 : i32, i32, i32
  }
}

</mosaic_0001>

<llo_original>
// kernel: tpu_custom_call.1
$region0: #{tpu_custom_call.1}
  #allocation0 [shape = 'u32[]', space=smem, size = 0x4, offset = 0x4, fixed_abs, tag = 'smem constant byte address 0x4 - core index']
  #allocation1 [shape = 'u32[144,128]{1,0:T(1,128)}', space=vmem, size = 0x12000, scoped, tag = 'internal scratch']
  #allocation2 [shape = 'f32[2,32]{1,0:T(2,128)}', space=vmem, size = 0x400, scoped, tag = 'scratch operand']
  #allocation3 [shape = 'f32[2,32]{1,0:T(2,128)}', space=vmem, size = 0x400, scoped, tag = 'scratch operand']
  %s0 = inlined_call_operand.hbm [shape: f32[2,16,128], index: 0, kind: input, shape index: {}]
  %s1 = inlined_call_operand.hbm [shape: f32[32,128], index: 1, kind: input, shape index: {}]
  %s2 = inlined_call_operand.hbm [shape: f32[2,16,32], index: 2, kind: output, shape index: {}]
  %s3 = sld [smem:[#allocation0]]
  $region53: #{tpu_custom_call.1} parent=0
    _
  %s5 = ssub.s32 1, %s3
  %s6 = scalar_select 0, %s5, %s3
  $region1: #{tpu_custom_call.1} parent=0
    #allocation4 [shape = 'u8[16384]{0}', space=vmem, size = 0x4000, scoped, tag = 'input window, operand 0']
    #allocation5 [shape = 's32[2]{0}', space=sflag, size = 0x8, scoped, tag = 'scoped memory for tpu_custom_call.1']
    #allocation6 [shape = 's32[2]{0}', space=sflag, size = 0x8, scoped, tag = 'scoped memory for tpu_custom_call.1']
    #allocation7 [shape = 'u8[16384]{0}', space=vmem, size = 0x4000, scoped, tag = 'input window, operand 1, single buffered']
    #allocation8 [shape = 's32[1]{0}', space=sflag, size = 0x4, scoped, tag = 'scoped memory for tpu_custom_call.1']
    #allocation9 [shape = 'u8[16384]{0}', space=vmem, size = 0x4000, scoped, tag = 'output window, operand 0']
    %7 = vsyncpa [#allocation5], 0
    %s8 = scalar_lea.sflag [#allocation5], 1
    %9 = vsyncpa %s8, 0
    %10 = vsyncpa [#allocation8], 0
    %11 = vsyncpa [#allocation6], 0
    %s12 = scalar_lea.sflag [#allocation6], 1
    %13 = vsyncpa %s12, 0
    loop: start=0, step=1, limit=4
    $region2: #{tpu_custom_call.1} parent=1 // loop_pre_header
      _
    $region3: #{tpu_custom_call.1} parent=1 // loop_header
      %s15 = sphi 0, %s19
      %p16 = scmp.ge.s32.totalorder %s15, 4
      %s25 = sphi 0, %s27
      %s28 = sphi 0, %s25
      %s29 = sphi 0, %s28
      %s45 = sphi 0, %s29
      %s49 = sphi 0, %s49
      %s51 = sphi 0, %s49
      %s52 = sphi 0, %s51
      %s66 = sphi 0, %s52
      %s72 = sphi 0, %s74
      %s75 = sphi 0, %s72
      %s76 = sphi 0, %s75
      %s92 = sphi 0, %s76
    $region4: #{tpu_custom_call.1} parent=1 // loop_header_branch
      %18 = sbr.rel (%p16) target = $region8
    $region5: #{tpu_custom_call.1} parent=1 // loop_body
      %s20 = ssub.s32 %s15, 1
      %s21 = ssub.s32 %s15, 2
      %s22 = sadd.s32 %s15, 1
      %s23 = ssub.s32 %s15, %s22
      %p24 = scmp.eq.s32.totalorder %s23, 0
      %s26 = sadd.s32 %s25, 1
      %s27 = scalar_select %p24, %s25, %s26
      %p30 = pneg %p24
      %p31 = scmp.eq.s32.totalorder %s15, 1
      %p32 = por %p30, %p31
      %p33 = scmp.ne.s32.totalorder %s25, %s28
      %p34 = scmp.eq.s32.totalorder %s15, 0
      %p35 = por %p33, %p34
      %p36 = scmp.ne.s32.totalorder %s25, %s28
      %p37 = scmp.eq.s32.totalorder %s20, 1
      %p38 = por %p36, %p37
      %p39 = scmp.ne.s32.totalorder %s28, %s29
      %p40 = scmp.eq.s32.totalorder %s20, 0
      %p41 = por %p39, %p40
      %p42 = scmp.ne.s32.totalorder %s28, %s29
      %p43 = scmp.eq.s32.totalorder %s21, 1
      %p44 = por %p42, %p43
      %p46 = scmp.ne.s32.totalorder %s29, %s45
      %p47 = scmp.eq.s32.totalorder %s21, 0
      %p48 = por %p46, %p47
      %s50 = sadd.s32 %s49, 1
      %p53 = scmp.eq.s32.totalorder %s15, 1
      %p54 = scmp.ne.s32.totalorder %s49, %s51
      %p55 = scmp.eq.s32.totalorder %s15, 0
      %p56 = por %p54, %p55
      %p57 = scmp.ne.s32.totalorder %s49, %s51
      %p58 = scmp.eq.s32.totalorder %s20, 1
      %p59 = por %p57, %p58
      %p60 = scmp.ne.s32.totalorder %s51, %s52
      %p61 = scmp.eq.s32.totalorder %s20, 0
      %p62 = por %p60, %p61
      %p63 = scmp.ne.s32.totalorder %s51, %s52
      %p64 = scmp.eq.s32.totalorder %s21, 1
      %p65 = por %p63, %p64
      %p67 = scmp.ne.s32.totalorder %s52, %s66
      %p68 = scmp.eq.s32.totalorder %s21, 0
      %p69 = por %p67, %p68
      %s70 = ssub.s32 %s15, %s22
      %p71 = scmp.eq.s32.totalorder %s70, 0
      %s73 = sadd.s32 %s72, 1
      %s74 = scalar_select %p71, %s72, %s73
      %p77 = pneg %p71
      %p78 = scmp.eq.s32.totalorder %s15, 1
      %p79 = por %p77, %p78
      %p80 = scmp.ne.s32.totalorder %s72, %s75
      %p81 = scmp.eq.s32.totalorder %s15, 0
      %p82 = por %p80, %p81
      %p83 = scmp.ne.s32.totalorder %s72, %s75
      %p84 = scmp.eq.s32.totalorder %s20, 1
      %p85 = por %p83, %p84
      %p86 = scmp.ne.s32.totalorder %s75, %s76
      %p87 = scmp.eq.s32.totalorder %s20, 0
      %p88 = por %p86, %p87
      %p89 = scmp.ne.s32.totalorder %s75, %s76
      %p90 = scmp.eq.s32.totalorder %s21, 1
      %p91 = por %p89, %p90
      %p93 = scmp.ne.s32.totalorder %s76, %s92
      %p94 = scmp.eq.s32.totalorder %s21, 0
      %p95 = por %p93, %p94
      %p96 = scmp.le.s32.totalorder 1, %s15
      %p97 = scmp.lt.s32.totalorder %s15, 3
      %p98 = pnand %p96, %p97
      %p99 = pneg %p98
      // Predicated region
      $region9: #{tpu_custom_call.1} parent=5 // pred_check
        _
      $region10: #{tpu_custom_call.1} parent=5 // pred_check_branch
        %101 = sbr.rel (%p98) target = $region12
      $region11: #{tpu_custom_call.1} parent=5 // pred_region
        %s102 = ssub.s32 %s15, 1
        // Predicated region
        $region13: #{tpu_custom_call.1} parent=11 // pred_check
          %p103 = pneg %p62
        $region14: #{tpu_custom_call.1} parent=11 // pred_check_branch
          %105 = sbr.rel (%p103) target = $region16
        $region15: #{tpu_custom_call.1} parent=11 // pred_region
          %s107 = ssub.s32 512, 512
          %108 = vsyncadd [#allocation8], %s107
          %s109 = sshll.u32 [#allocation7], 4
          %s110 = int_to_ptr.vmem [resolvable:$true] %s109
          %115 = dma.hbm_to_vmem [thread:$0]  %s1, 512, %s110, [#allocation8], 128, 128, 8
        $region16: #{tpu_custom_call.1} parent=11 // pred_fallthru
          _
      $region12: #{tpu_custom_call.1} parent=5 // pred_fallthru
        _
      %p116 = scmp.lt.s32.totalorder %s15, 2
      // Predicated region
      $region17: #{tpu_custom_call.1} parent=5 // pred_check
        %p117 = pneg %p116
      $region18: #{tpu_custom_call.1} parent=5 // pred_check_branch
        %119 = sbr.rel (%p117) target = $region20
      $region19: #{tpu_custom_call.1} parent=5 // pred_region
        // Predicated region
        $region21: #{tpu_custom_call.1} parent=19 // pred_check
          %p120 = pneg %p35
        $region22: #{tpu_custom_call.1} parent=19 // pred_check_branch
          %122 = sbr.rel (%p120) target = $region24
        $region23: #{tpu_custom_call.1} parent=19 // pred_region
          %s123 = sand.u32 %s25, 1
          %s124 = scalar_lea.sflag [#allocation5], %s123
          %s125 = sand.u32 %s25, 1
          %s126 = smul.addr %s125, 16
          %s127 = scalar_lea.vmem [#allocation4], %s126
          %s129 = ssub.s32 256, 256
          %130 = vsyncadd %s124, %s129
          %s131 = smul.addr %s15, 128
          %s132 = scalar_lea.hbm %s0, %s131
          %s133 = sshll.u32 %s127, 4
          %s134 = int_to_ptr.vmem [resolvable:$true] %s133
          %139 = dma.hbm_to_vmem [thread:$0]  %s132, 256, %s134, %s124, 256, 128, 8
        $region24: #{tpu_custom_call.1} parent=19 // pred_fallthru
          _
      $region20: #{tpu_custom_call.1} parent=5 // pred_fallthru
        _
      %p140 = scmp.le.s32.totalorder 1, %s15
      %p141 = scmp.lt.s32.totalorder %s15, 3
      %p142 = pnand %p140, %p141
      %p143 = pneg %p142
      // Predicated region
      $region25: #{tpu_custom_call.1} parent=5 // pred_check
        _
      $region26: #{tpu_custom_call.1} parent=5 // pred_check_branch
        %145 = sbr.rel (%p142) target = $region28
      $region27: #{tpu_custom_call.1} parent=5 // pred_region
        %s146 = ssub.s32 %s15, 1
        %s147 = sand.u32 %s28, 1
        %s148 = scalar_lea.sflag [#allocation5], %s147
        %s149 = sand.u32 %s28, 1
        %s150 = smul.addr %s149, 16
        %s151 = scalar_lea.vmem [#allocation4], %s150
        // Predicated region
        $region29: #{tpu_custom_call.1} parent=27 // pred_check
          %p152 = pneg %p41
        $region30: #{tpu_custom_call.1} parent=27 // pred_check_branch
          %154 = sbr.rel (%p152) target = $region32
        $region31: #{tpu_custom_call.1} parent=27 // pred_region
          %155 = dma.done %s148, 256
        $region32: #{tpu_custom_call.1} parent=27 // pred_fallthru
          _
        // Predicated region
        $region33: #{tpu_custom_call.1} parent=27 // pred_check
          %p156 = pneg %p62
        $region34: #{tpu_custom_call.1} parent=27 // pred_check_branch
          %158 = sbr.rel (%p156) target = $region36
        $region35: #{tpu_custom_call.1} parent=27 // pred_region
          %159 = dma.done [#allocation8], 512
        $region36: #{tpu_custom_call.1} parent=27 // pred_fallthru
          _
        %s160 = sand.u32 %s28, 1
        %s161 = scalar_lea.sflag [#allocation5], %s160
        %s162 = sand.u32 %s28, 1
        %s163 = smul.addr %s162, 16
        %s164 = scalar_lea.vmem [#allocation4], %s163
        %p165 = pneg %p41
        %p166 = pneg %p38
        %p167 = pneg %p62
        %p168 = pneg %p59
        %p169 = pneg %p88
        %p170 = pneg %p85
        %s171 = sand.u32 %s75, 1
        %s172 = scalar_lea.sflag [#allocation6], %s171
        %s173 = sand.u32 %s75, 1
        %s174 = smul.addr %s173, 16
        %s175 = scalar_lea.vmem [#allocation9], %s174
        %p176 = scmp.eq.s32.totalorder %s20, 0
        // Predicated region
        $region37: #{tpu_custom_call.1} parent=27 // pred_check
          %p177 = pneg %p176
        $region38: #{tpu_custom_call.1} parent=27 // pred_check_branch
          %179 = sbr.rel (%p177) target = $region40
        $region39: #{tpu_custom_call.1} parent=27 // pred_region
          %vm180 = vcmask 254976
          %181 = vst.msk [vmem:[#allocation2] sm:$0x3] %vm180, 0.0
          %182 = vst.msk [vmem:[#allocation3] sm:$0x3] %vm180, 0.0
        $region40: #{tpu_custom_call.1} parent=27 // pred_fallthru
          _
        %v183 = vld [vmem:[#allocation7] sm:$0xff]
        %v184 = vld [vmem:[#allocation7 + $0x8] sm:$0xff]
        %v185 = vld [vmem:[#allocation7 + $0x10] sm:$0xff]
        %v186 = vld [vmem:[#allocation7 + $0x18] sm:$0xff]
        %v187 = vld [vmem:[#allocation2] sm:$0x3]
        %v188 = vld [vmem:[#allocation3] sm:$0x3]
        %v189 = vld [vmem:[%s151] sm:$0x1]
        %v190 = vld [vmem:[%s151 + $0x8] sm:$0x1]
        %vm191 = vcmask 261120
        %v193 = vsel %vm191, %v187, 0
        %195 = vmatprep.subr.mxu0 0.0
        %196 = vmatpush1.msra.mxu0 %v183
        %197 = vmatprep.subr.mxu0 0.0
        %198 = vmatpush1.msra.mxu0 %v184
        %199 = vmatprep.subr.mxu0 0.0
        %200 = vmatpush1.msra.mxu0 %v185
        %201 = vmatprep.subr.mxu0 0.0
        %202 = vmatpush1.msra.mxu0 %v186
        %203 = vmatprep.subr.mxu0 0.0
        %204 = vmatpush1.msra.mxu0 0.0
        %205 = vmatprep.subr.mxu0 0.0
        %206 = vmatpush1.msra.mxu0 0.0
        %207 = vmatprep.subr.mxu0 0.0
        %208 = vmatpush1.msra.mxu0 0.0
        %209 = vmatprep.subr.mxu0 0.0
        %210 = vmatpush1.msra.mxu0 0.0
        %211 = vmatprep.subr.mxu0 0.0
        %212 = vmatpush1.msra.mxu0 0.0
        %213 = vmatprep.subr.mxu0 0.0
        %214 = vmatpush1.msra.mxu0 0.0
        %215 = vmatprep.subr.mxu0 0.0
        %216 = vmatpush1.msra.mxu0 0.0
        %217 = vmatprep.subr.mxu0 0.0
        %218 = vmatpush1.msra.mxu0 0.0
        %219 = vmatprep.subr.mxu0 0.0
        %220 = vmatpush1.msra.mxu0 0.0
        %221 = vmatprep.subr.mxu0 0.0
        %222 = vmatpush1.msra.mxu0 0.0
        %223 = vmatprep.subr.mxu0 0.0
        %224 = vmatpush1.msra.mxu0 0.0
        %225 = vmatprep.subr.mxu0 0.0
        %226 = vmatpush1.msra.mxu0 0.0
        %227 = vmatprep.subr.mxu0 0.0
        %228 = vmatpush1.msra.mxu0 0.0
        %229 = vmatprep.subr.mxu0 0.0
        %230 = vmatpush1.msra.mxu0 0.0
        %231 = vmatprep.subr.mxu0 0.0
        %232 = vmatpush1.msra.mxu0 0.0
        %233 = vmatprep.subr.mxu0 0.0
        %234 = vmatpush1.msra.mxu0 0.0
        %235 = vmatprep.subr.mxu0 0.0
        %236 = vmatpush1.msra.mxu0 0.0
        %237 = vmatprep.subr.mxu0 0.0
        %238 = vmatpush1.msra.mxu0 0.0
        %239 = vmatprep.subr.mxu0 0.0
        %240 = vmatpush1.msra.mxu0 0.0
        %241 = vmatprep.subr.mxu0 0.0
        %242 = vmatpush1.msra.mxu0 0.0
        %243 = vmatprep.subr.mxu0 0.0
        %244 = vmatpush1.msra.mxu0 0.0
        %245 = vmatprep.subr.mxu0 0.0
        %246 = vmatpush1.msra.mxu0 0.0
        %247 = vmatprep.subr.mxu0 0.0
        %248 = vmatpush1.msra.mxu0 0.0
        %249 = vmatprep.subr.mxu0 0.0
        %250 = vmatpush1.msra.mxu0 0.0
        %251 = vmatprep.subr.mxu0 0.0
        %252 = vmatpush1.msra.mxu0 0.0
        %253 = vmatprep.subr.mxu0 0.0
        %254 = vmatpush1.msra.mxu0 0.0
        %255 = vmatprep.subr.mxu0 0.0
        %256 = vmatpush1.msra.mxu0 0.0
        %257 = vmatprep.subr.mxu0 0.0
        %258 = vmatpush1.msra.mxu0 0.0
        %259 = vmatprep.mubr.f32.mxu0 0.0
        %260 = vmatmul.mubr.f32.gmra.mrb[0].mxu0 %v193
        %v261 = vpop.f32.mrb[0].mxu0
        %v262 = vadd.f32 0.0, %v261
        %v263 = vpop.f32.mrb[0].mxu0
        %264 = vdwg.mxu0
        %v266 = vrot.slane %v262, 1
        %v269 = vadd.f32 %v189, %v262
        %v270 = vadd.f32 %v190, %v266
        %v271 = vmul.f32 %v269, 0.5
        %v272 = vmul.f32 %v270, 0.5
        %v273 = vtanh.pop %v271
        %v274 = vtanh.pop %v272
        %v275 = vmul.f32 %v273, 0.5
        %v276 = vmul.f32 %v274, 0.5
        %v277 = vadd.f32 %v275, 0.5
        %v278 = vadd.f32 %v276, 0.5
        %v279 = vtanh.pop %v269
        %v280 = vtanh.pop %v270
        %v282 = vrot.slane %v188, 1
        %283 = vrot.lane.b32.xlu0 %v188, 32
        %v284 = vpop.permute.xlu0 %283
        %285 = vrot.lane.b32.xlu0 %v282, 32
        %v286 = vpop.permute.xlu0 %285
        %v289 = vmul.f32 %v277, %v284
        %v290 = vmul.f32 %v278, %v286
        %293 = vrot.lane.b32.xlu0 %v279, 64
        %v294 = vpop.permute.xlu0 %293
        %295 = vrot.lane.b32.xlu0 %v280, 64
        %v296 = vpop.permute.xlu0 %295
        %v299 = vmul.f32 %v277, %v294
        %v300 = vmul.f32 %v278, %v296
        %303 = vrot.lane.b32.xlu0 %v299, 32
        %v304 = vpop.permute.xlu0 %303
        %305 = vrot.lane.b32.xlu0 %v300, 32
        %v306 = vpop.permute.xlu0 %305
        %v309 = vadd.f32 %v289, %v304
        %v310 = vadd.f32 %v290, %v306
        %v311 = vtanh.pop %v309
        %v312 = vtanh.pop %v310
        %315 = vrot.lane.b32.xlu0 %v311, 64
        %v316 = vpop.permute.xlu0 %315
        %317 = vrot.lane.b32.xlu0 %v312, 64
        %v318 = vpop.permute.xlu0 %317
        %v321 = vmul.f32 %v277, %v316
        %v322 = vmul.f32 %v278, %v318
        %325 = vrot.lane.b32.xlu0 %v321, 32
        %v326 = vpop.permute.xlu0 %325
        %327 = vrot.lane.b32.xlu0 %v322, 32
        %v328 = vpop.permute.xlu0 %327
        %vm331 = vcmask 253952
        %332 = vst.msk [vmem:[%s175] sm:$0x1] %vm331, %v326
        %333 = vst.msk [vmem:[%s175 + $0x8] sm:$0x1] %vm331, %v328
        %v334 = vld [vmem:[%s151 + $0x1] sm:$0x1]
        %v335 = vld [vmem:[%s151 + $0x9] sm:$0x1]
        %v336 = vrot.slane %v322, 7
        %vm337 = vcmask 1041409
        %v338 = vsel %vm337, %v336, %v321
        %339 = vrot.lane.b32.xlu0 %v338, 32
        %v340 = vpop.permute.xlu0 %339
        %v341 = vsel %vm191, %v340, 0
        %343 = vmatprep.subr.mxu0 0.0
        %344 = vmatpush1.msra.mxu0 %v183
        %345 = vmatprep.subr.mxu0 0.0
        %346 = vmatpush1.msra.mxu0 %v184
        %347 = vmatprep.subr.mxu0 0.0
        %348 = vmatpush1.msra.mxu0 %v185
        %349 = vmatprep.subr.mxu0 0.0
        %350 = vmatpush1.msra.mxu0 %v186
        %351 = vmatprep.subr.mxu0 0.0
        %352 = vmatpush1.msra.mxu0 0.0
        %353 = vmatprep.subr.mxu0 0.0
        %354 = vmatpush1.msra.mxu0 0.0
        %355 = vmatprep.subr.mxu0 0.0
        %356 = vmatpush1.msra.mxu0 0.0
        %357 = vmatprep.subr.mxu0 0.0
        %358 = vmatpush1.msra.mxu0 0.0
        %359 = vmatprep.subr.mxu0 0.0
        %360 = vmatpush1.msra.mxu0 0.0
        %361 = vmatprep.subr.mxu0 0.0
        %362 = vmatpush1.msra.mxu0 0.0
        %363 = vmatprep.subr.mxu0 0.0
        %364 = vmatpush1.msra.mxu0 0.0
        %365 = vmatprep.subr.mxu0 0.0
        %366 = vmatpush1.msra.mxu0 0.0
        %367 = vmatprep.subr.mxu0 0.0
        %368 = vmatpush1.msra.mxu0 0.0
        %369 = vmatprep.subr.mxu0 0.0
        %370 = vmatpush1.msra.mxu0 0.0
        %371 = vmatprep.subr.mxu0 0.0
        %372 = vmatpush1.msra.mxu0 0.0
        %373 = vmatprep.subr.mxu0 0.0
        %374 = vmatpush1.msra.mxu0 0.0
        %375 = vmatprep.subr.mxu0 0.0
        %376 = vmatpush1.msra.mxu0 0.0
        %377 = vmatprep.subr.mxu0 0.0
        %378 = vmatpush1.msra.mxu0 0.0
        %379 = vmatprep.subr.mxu0 0.0
        %380 = vmatpush1.msra.mxu0 0.0
        %381 = vmatprep.subr.mxu0 0.0
        %382 = vmatpush1.msra.mxu0 0.0
        %383 = vmatprep.subr.mxu0 0.0
        %384 = vmatpush1.msra.mxu0 0.0
        %385 = vmatprep.subr.mxu0 0.0
        %386 = vmatpush1.msra.mxu0 0.0
        %387 = vmatprep.subr.mxu0 0.0
        %388 = vmatpush1.msra.mxu0 0.0
        %389 = vmatprep.subr.mxu0 0.0
        %390 = vmatpush1.msra.mxu0 0.0
        %391 = vmatprep.subr.mxu0 0.0
        %392 = vmatpush1.msra.mxu0 0.0
        %393 = vmatprep.subr.mxu0 0.0
        %394 = vmatpush1.msra.mxu0 0.0
        %395 = vmatprep.subr.mxu0 0.0
        %396 = vmatpush1.msra.mxu0 0.0
        %397 = vmatprep.subr.mxu0 0.0
        %398 = vmatpush1.msra.mxu0 0.0
        %399 = vmatprep.subr.mxu0 0.0
        %400 = vmatpush1.msra.mxu0 0.0
        %401 = vmatprep.subr.mxu0 0.0
        %402 = vmatpush1.msra.mxu0 0.0
        %403 = vmatprep.subr.mxu0 0.0
        %404 = vmatpush1.msra.mxu0 0.0
        %405 = vmatprep.subr.mxu0 0.0
        %406 = vmatpush1.msra.mxu0 0.0
        %407 = vmatprep.mubr.f32.mxu0 0.0
        %408 = vmatmul.mubr.f32.gmra.mrb[0].mxu0 %v341
        %v409 = vpop.f32.mrb[0].mxu0
        %v410 = vadd.f32 0.0, %v409
        %v411 = vpop.f32.mrb[0].mxu0
        %412 = vdwg.mxu0
        %v414 = vrot.slane %v410, 1
        %v417 = vadd.f32 %v334, %v410
        %v418 = vadd.f32 %v335, %v414
        %v419 = vmul.f32 %v417, 0.5
        %v420 = vmul.f32 %v418, 0.5
        %v421 = vtanh.pop %v419
        %v422 = vtanh.pop %v420
        %v423 = vmul.f32 %v421, 0.5
        %v424 = vmul.f32 %v422, 0.5
        %v425 = vadd.f32 %v423, 0.5
        %v426 = vadd.f32 %v424, 0.5
        %v427 = vtanh.pop %v417
        %v428 = vtanh.pop %v418
        %v429 = vmul.f32 %v425, %v309
        %v430 = vmul.f32 %v426, %v310
        %433 = vrot.lane.b32.xlu0 %v427, 64
        %v434 = vpop.permute.xlu0 %433
        %435 = vrot.lane.b32.xlu0 %v428, 64
        %v436 = vpop.permute.xlu0 %435
        %v439 = vmul.f32 %v425, %v434
        %v440 = vmul.f32 %v426, %v436
        %443 = vrot.lane.b32.xlu0 %v439, 32
        %v444 = vpop.permute.xlu0 %443
        %445 = vrot.lane.b32.xlu0 %v440, 32
        %v446 = vpop.permute.xlu0 %445
        %v449 = vadd.f32 %v429, %v444
        %v450 = vadd.f32 %v430, %v446
        %v451 = vtanh.pop %v449
        %v452 = vtanh.pop %v450
        %455 = vrot.lane.b32.xlu0 %v451, 64
        %v456 = vpop.permute.xlu0 %455
        %457 = vrot.lane.b32.xlu0 %v452, 64
        %v458 = vpop.permute.xlu0 %457
        %v461 = vmul.f32 %v425, %v456
        %v462 = vmul.f32 %v426, %v458
        %465 = vrot.lane.b32.xlu0 %v461, 32
        %v466 = vpop.permute.xlu0 %465
        %467 = vrot.lane.b32.xlu0 %v462, 32
        %v468 = vpop.permute.xlu0 %467
        %471 = vst.msk [vmem:[%s175 + $0x1] sm:$0x1] %vm331, %v466
        %472 = vst.msk [vmem:[%s175 + $0x9] sm:$0x1] %vm331, %v468
        %v473 = vld [vmem:[%s151 + $0x2] sm:$0x1]
        %v474 = vld [vmem:[%s151 + $0xa] sm:$0x1]
        %v475 = vrot.slane %v462, 7
        %v476 = vsel %vm337, %v475, %v461
        %477 = vrot.lane.b32.xlu0 %v476, 32
        %v478 = vpop.permute.xlu0 %477
        %v479 = vsel %vm191, %v478, 0
        %481 = vmatprep.subr.mxu0 0.0
        %482 = vmatpush1.msra.mxu0 %v183
        %483 = vmatprep.subr.mxu0 0.0
        %484 = vmatpush1.msra.mxu0 %v184
        %485 = vmatprep.subr.mxu0 0.0
        %486 = vmatpush1.msra.mxu0 %v185
        %487 = vmatprep.subr.mxu0 0.0
        %488 = vmatpush1.msra.mxu0 %v186
        %489 = vmatprep.subr.mxu0 0.0
        %490 = vmatpush1.msra.mxu0 0.0
        %491 = vmatprep.subr.mxu0 0.0
        %492 = vmatpush1.msra.mxu0 0.0
        %493 = vmatprep.subr.mxu0 0.0
        %494 = vmatpush1.msra.mxu0 0.0
        %495 = vmatprep.subr.mxu0 0.0
        %496 = vmatpush1.msra.mxu0 0.0
        %497 = vmatprep.subr.mxu0 0.0
        %498 = vmatpush1.msra.mxu0 0.0
        %499 = vmatprep.subr.mxu0 0.0
        %500 = vmatpush1.msra.mxu0 0.0
        %501 = vmatprep.subr.mxu0 0.0
        %502 = vmatpush1.msra.mxu0 0.0
        %503 = vmatprep.subr.mxu0 0.0
        %504 = vmatpush1.msra.mxu0 0.0
        %505 = vmatprep.subr.mxu0 0.0
        %506 = vmatpush1.msra.mxu0 0.0
        %507 = vmatprep.subr.mxu0 0.0
        %508 = vmatpush1.msra.mxu0 0.0
        %509 = vmatprep.subr.mxu0 0.0
        %510 = vmatpush1.msra.mxu0 0.0
        %511 = vmatprep.subr.mxu0 0.0
        %512 = vmatpush1.msra.mxu0 0.0
        %513 = vmatprep.subr.mxu0 0.0
        %514 = vmatpush1.msra.mxu0 0.0
        %515 = vmatprep.subr.mxu0 0.0
        %516 = vmatpush1.msra.mxu0 0.0
        %517 = vmatprep.subr.mxu0 0.0
        %518 = vmatpush1.msra.mxu0 0.0
        %519 = vmatprep.subr.mxu0 0.0
        %520 = vmatpush1.msra.mxu0 0.0
        %521 = vmatprep.subr.mxu0 0.0
        %522 = vmatpush1.msra.mxu0 0.0
        %523 = vmatprep.subr.mxu0 0.0
        %524 = vmatpush1.msra.mxu0 0.0
        %525 = vmatprep.subr.mxu0 0.0
        %526 = vmatpush1.msra.mxu0 0.0
        %527 = vmatprep.subr.mxu0 0.0
        %528 = vmatpush1.msra.mxu0 0.0
        %529 = vmatprep.subr.mxu0 0.0
        %530 = vmatpush1.msra.mxu0 0.0
        %531 = vmatprep.subr.mxu0 0.0
        %532 = vmatpush1.msra.mxu0 0.0
        %533 = vmatprep.subr.mxu0 0.0
        %534 = vmatpush1.msra.mxu0 0.0
        %535 = vmatprep.subr.mxu0 0.0
        %536 = vmatpush1.msra.mxu0 0.0
        %537 = vmatprep.subr.mxu0 0.0
        %538 = vmatpush1.msra.mxu0 0.0
        %539 = vmatprep.subr.mxu0 0.0
        %540 = vmatpush1.msra.mxu0 0.0
        %541 = vmatprep.subr.mxu0 0.0
        %542 = vmatpush1.msra.mxu0 0.0
        %543 = vmatprep.subr.mxu0 0.0
        %544 = vmatpush1.msra.mxu0 0.0
        %545 = vmatprep.mubr.f32.mxu0 0.0
        %546 = vmatmul.mubr.f32.gmra.mrb[0].mxu0 %v479
        %v547 = vpop.f32.mrb[0].mxu0
        %v548 = vadd.f32 0.0, %v547
        %v549 = vpop.f32.mrb[0].mxu0
        %550 = vdwg.mxu0
        %v552 = vrot.slane %v548, 1
        %v555 = vadd.f32 %v473, %v548
        %v556 = vadd.f32 %v474, %v552
        %v557 = vmul.f32 %v555, 0.5
        %v558 = vmul.f32 %v556, 0.5
        %v559 = vtanh.pop %v557
        %v560 = vtanh.pop %v558
        %v561 = vmul.f32 %v559, 0.5
        %v562 = vmul.f32 %v560, 0.5
        %v563 = vadd.f32 %v561, 0.5
        %v564 = vadd.f32 %v562, 0.5
        %v565 = vtanh.pop %v555
        %v566 = vtanh.pop %v556
        %v567 = vmul.f32 %v563, %v449
        %v568 = vmul.f32 %v564, %v450
        %571 = vrot.lane.b32.xlu0 %v565, 64
        %v572 = vpop.permute.xlu0 %571
        %573 = vrot.lane.b32.xlu0 %v566, 64
        %v574 = vpop.permute.xlu0 %573
        %v577 = vmul.f32 %v563, %v572
        %v578 = vmul.f32 %v564, %v574
        %581 = vrot.lane.b32.xlu0 %v577, 32
        %v582 = vpop.permute.xlu0 %581
        %583 = vrot.lane.b32.xlu0 %v578, 32
        %v584 = vpop.permute.xlu0 %583
        %v587 = vadd.f32 %v567, %v582
        %v588 = vadd.f32 %v568, %v584
        %v589 = vtanh.pop %v587
        %v590 = vtanh.pop %v588
        %593 = vrot.lane.b32.xlu0 %v589, 64
        %v594 = vpop.permute.xlu0 %593
        %595 = vrot.lane.b32.xlu0 %v590, 64
        %v596 = vpop.permute.xlu0 %595
        %v599 = vmul.f32 %v563, %v594
        %v600 = vmul.f32 %v564, %v596
        %603 = vrot.lane.b32.xlu0 %v599, 32
        %v604 = vpop.permute.xlu0 %603
        %605 = vrot.lane.b32.xlu0 %v600, 32
        %v606 = vpop.permute.xlu0 %605
        %609 = vst.msk [vmem:[%s175 + $0x2] sm:$0x1] %vm331, %v604
        %610 = vst.msk [vmem:[%s175 + $0xa] sm:$0x1] %vm331, %v606
        %v611 = vld [vmem:[%s151 + $0x3] sm:$0x1]
        %v612 = vld [vmem:[%s151 + $0xb] sm:$0x1]
        %v613 = vrot.slane %v600, 7
        %v614 = vsel %vm337, %v613, %v599
        %615 = vrot.lane.b32.xlu0 %v614, 32
        %v616 = vpop.permute.xlu0 %615
        %v617 = vsel %vm191, %v616, 0
        %619 = vmatprep.subr.mxu0 0.0
        %620 = vmatpush1.msra.mxu0 %v183
        %621 = vmatprep.subr.mxu0 0.0
        %622 = vmatpush1.msra.mxu0 %v184
        %623 = vmatprep.subr.mxu0 0.0
        %624 = vmatpush1.msra.mxu0 %v185
        %625 = vmatprep.subr.mxu0 0.0
        %626 = vmatpush1.msra.mxu0 %v186
        %627 = vmatprep.subr.mxu0 0.0
        %628 = vmatpush1.msra.mxu0 0.0
        %629 = vmatprep.subr.mxu0 0.0
        %630 = vmatpush1.msra.mxu0 0.0
        %631 = vmatprep.subr.mxu0 0.0
        %632 = vmatpush1.msra.mxu0 0.0
        %633 = vmatprep.subr.mxu0 0.0
        %634 = vmatpush1.msra.mxu0 0.0
        %635 = vmatprep.subr.mxu0 0.0
        %636 = vmatpush1.msra.mxu0 0.0
        %637 = vmatprep.subr.mxu0 0.0
        %638 = vmatpush1.msra.mxu0 0.0
        %639 = vmatprep.subr.mxu0 0.0
        %640 = vmatpush1.msra.mxu0 0.0
        %641 = vmatprep.subr.mxu0 0.0
        %642 = vmatpush1.msra.mxu0 0.0
        %643 = vmatprep.subr.mxu0 0.0
        %644 = vmatpush1.msra.mxu0 0.0
        %645 = vmatprep.subr.mxu0 0.0
        %646 = vmatpush1.msra.mxu0 0.0
        %647 = vmatprep.subr.mxu0 0.0
        %648 = vmatpush1.msra.mxu0 0.0
        %649 = vmatprep.subr.mxu0 0.0
        %650 = vmatpush1.msra.mxu0 0.0
        %651 = vmatprep.subr.mxu0 0.0
        %652 = vmatpush1.msra.mxu0 0.0
        %653 = vmatprep.subr.mxu0 0.0
        %654 = vmatpush1.msra.mxu0 0.0
        %655 = vmatprep.subr.mxu0 0.0
        %656 = vmatpush1.msra.mxu0 0.0
        %657 = vmatprep.subr.mxu0 0.0
        %658 = vmatpush1.msra.mxu0 0.0
        %659 = vmatprep.subr.mxu0 0.0
        %660 = vmatpush1.msra.mxu0 0.0
        %661 = vmatprep.subr.mxu0 0.0
        %662 = vmatpush1.msra.mxu0 0.0
        %663 = vmatprep.subr.mxu0 0.0
        %664 = vmatpush1.msra.mxu0 0.0
        %665 = vmatprep.subr.mxu0 0.0
        %666 = vmatpush1.msra.mxu0 0.0
        %667 = vmatprep.subr.mxu0 0.0
        %668 = vmatpush1.msra.mxu0 0.0
        %669 = vmatprep.subr.mxu0 0.0
        %670 = vmatpush1.msra.mxu0 0.0
        %671 = vmatprep.subr.mxu0 0.0
        %672 = vmatpush1.msra.mxu0 0.0
        %673 = vmatprep.subr.mxu0 0.0
        %674 = vmatpush1.msra.mxu0 0.0
        %675 = vmatprep.subr.mxu0 0.0
        %676 = vmatpush1.msra.mxu0 0.0
        %677 = vmatprep.subr.mxu0 0.0
        %678 = vmatpush1.msra.mxu0 0.0
        %679 = vmatprep.subr.mxu0 0.0
        %680 = vmatpush1.msra.mxu0 0.0
        %681 = vmatprep.subr.mxu0 0.0
        %682 = vmatpush1.msra.mxu0 0.0
        %683 = vmatprep.mubr.f32.mxu0 0.0
        %684 = vmatmul.mubr.f32.gmra.mrb[0].mxu0 %v617
        %v685 = vpop.f32.mrb[0].mxu0
        %v686 = vadd.f32 0.0, %v685
        %v687 = vpop.f32.mrb[0].mxu0
        %688 = vdwg.mxu0
        %v690 = vrot.slane %v686, 1
        %v693 = vadd.f32 %v611, %v686
        %v694 = vadd.f32 %v612, %v690
        %v695 = vmul.f32 %v693, 0.5
        %v696 = vmul.f32 %v694, 0.5
        %v697 = vtanh.pop %v695
        %v698 = vtanh.pop %v696
        %v699 = vmul.f32 %v697, 0.5
        %v700 = vmul.f32 %v698, 0.5
        %v701 = vadd.f32 %v699, 0.5
        %v702 = vadd.f32 %v700, 0.5
        %v703 = vtanh.pop %v693
        %v704 = vtanh.pop %v694
        %v705 = vmul.f32 %v701, %v587
        %v706 = vmul.f32 %v702, %v588
        %709 = vrot.lane.b32.xlu0 %v703, 64
        %v710 = vpop.permute.xlu0 %709
        %711 = vrot.lane.b32.xlu0 %v704, 64
        %v712 = vpop.permute.xlu0 %711
        %v715 = vmul.f32 %v701, %v710
        %v716 = vmul.f32 %v702, %v712
        %719 = vrot.lane.b32.xlu0 %v715, 32
        %v720 = vpop.permute.xlu0 %719
        %721 = vrot.lane.b32.xlu0 %v716, 32
        %v722 = vpop.permute.xlu0 %721
        %v725 = vadd.f32 %v705, %v720
        %v726 = vadd.f32 %v706, %v722
        %v727 = vtanh.pop %v725
        %v728 = vtanh.pop %v726
        %731 = vrot.lane.b32.xlu0 %v727, 64
        %v732 = vpop.permute.xlu0 %731
        %733 = vrot.lane.b32.xlu0 %v728, 64
        %v734 = vpop.permute.xlu0 %733
        %v737 = vmul.f32 %v701, %v732
        %v738 = vmul.f32 %v702, %v734
        %741 = vrot.lane.b32.xlu0 %v737, 32
        %v742 = vpop.permute.xlu0 %741
        %743 = vrot.lane.b32.xlu0 %v738, 32
        %v744 = vpop.permute.xlu0 %743
        %747 = vst.msk [vmem:[%s175 + $0x3] sm:$0x1] %vm331, %v742
        %748 = vst.msk [vmem:[%s175 + $0xb] sm:$0x1] %vm331, %v744
        %v749 = vld [vmem:[%s151 + $0x4] sm:$0x1]
        %v750 = vld [vmem:[%s151 + $0xc] sm:$0x1]
        %v751 = vrot.slane %v738, 7
        %v752 = vsel %vm337, %v751, %v737
        %753 = vrot.lane.b32.xlu0 %v752, 32
        %v754 = vpop.permute.xlu0 %753
        %v755 = vsel %vm191, %v754, 0
        %757 = vmatprep.subr.mxu0 0.0
        %758 = vmatpush1.msra.mxu0 %v183
        %759 = vmatprep.subr.mxu0 0.0
        %760 = vmatpush1.msra.mxu0 %v184
        %761 = vmatprep.subr.mxu0 0.0
        %762 = vmatpush1.msra.mxu0 %v185
        %763 = vmatprep.subr.mxu0 0.0
        %764 = vmatpush1.msra.mxu0 %v186
        %765 = vmatprep.subr.mxu0 0.0
        %766 = vmatpush1.msra.mxu0 0.0
        %767 = vmatprep.subr.mxu0 0.0
        %768 = vmatpush1.msra.mxu0 0.0
        %769 = vmatprep.subr.mxu0 0.0
        %770 = vmatpush1.msra.mxu0 0.0
        %771 = vmatprep.subr.mxu0 0.0
        %772 = vmatpush1.msra.mxu0 0.0
        %773 = vmatprep.subr.mxu0 0.0
        %774 = vmatpush1.msra.mxu0 0.0
        %775 = vmatprep.subr.mxu0 0.0
        %776 = vmatpush1.msra.mxu0 0.0
        %777 = vmatprep.subr.mxu0 0.0
        %778 = vmatpush1.msra.mxu0 0.0
        %779 = vmatprep.subr.mxu0 0.0
        %780 = vmatpush1.msra.mxu0 0.0
        %781 = vmatprep.subr.mxu0 0.0
        %782 = vmatpush1.msra.mxu0 0.0
        %783 = vmatprep.subr.mxu0 0.0
        %784 = vmatpush1.msra.mxu0 0.0
        %785 = vmatprep.subr.mxu0 0.0
        %786 = vmatpush1.msra.mxu0 0.0
        %787 = vmatprep.subr.mxu0 0.0
        %788 = vmatpush1.msra.mxu0 0.0
        %789 = vmatprep.subr.mxu0 0.0
        %790 = vmatpush1.msra.mxu0 0.0
        %791 = vmatprep.subr.mxu0 0.0
        %792 = vmatpush1.msra.mxu0 0.0
        %793 = vmatprep.subr.mxu0 0.0
        %794 = vmatpush1.msra.mxu0 0.0
        %795 = vmatprep.subr.mxu0 0.0
        %796 = vmatpush1.msra.mxu0 0.0
        %797 = vmatprep.subr.mxu0 0.0
        %798 = vmatpush1.msra.mxu0 0.0
        %799 = vmatprep.subr.mxu0 0.0
        %800 = vmatpush1.msra.mxu0 0.0
        %801 = vmatprep.subr.mxu0 0.0
        %802 = vmatpush1.msra.mxu0 0.0
        %803 = vmatprep.subr.mxu0 0.0
        %804 = vmatpush1.msra.mxu0 0.0
        %805 = vmatprep.subr.mxu0 0.0
        %806 = vmatpush1.msra.mxu0 0.0
        %807 = vmatprep.subr.mxu0 0.0
        %808 = vmatpush1.msra.mxu0 0.0
        %809 = vmatprep.subr.mxu0 0.0
        %810 = vmatpush1.msra.mxu0 0.0
        %811 = vmatprep.subr.mxu0 0.0
        %812 = vmatpush1.msra.mxu0 0.0
        %813 = vmatprep.subr.mxu0 0.0
        %814 = vmatpush1.msra.mxu0 0.0
        %815 = vmatprep.subr.mxu0 0.0
        %816 = vmatpush1.msra.mxu0 0.0
        %817 = vmatprep.subr.mxu0 0.0
        %818 = vmatpush1.msra.mxu0 0.0
        %819 = vmatprep.subr.mxu0 0.0
        %820 = vmatpush1.msra.mxu0 0.0
        %821 = vmatprep.mubr.f32.mxu0 0.0
        %822 = vmatmul.mubr.f32.gmra.mrb[0].mxu0 %v755
        %v823 = vpop.f32.mrb[0].mxu0
        %v824 = vadd.f32 0.0, %v823
        %v825 = vpop.f32.mrb[0].mxu0
        %826 = vdwg.mxu0
        %v828 = vrot.slane %v824, 1
        %v831 = vadd.f32 %v749, %v824
        %v832 = vadd.f32 %v750, %v828
        %v833 = vmul.f32 %v831, 0.5
        %v834 = vmul.f32 %v832, 0.5
        %v835 = vtanh.pop %v833
        %v836 = vtanh.pop %v834
        %v837 = vmul.f32 %v835, 0.5
        %v838 = vmul.f32 %v836, 0.5
        %v839 = vadd.f32 %v837, 0.5
        %v840 = vadd.f32 %v838, 0.5
        %v841 = vtanh.pop %v831
        %v842 = vtanh.pop %v832
        %v843 = vmul.f32 %v839, %v725
        %v844 = vmul.f32 %v840, %v726
        %847 = vrot.lane.b32.xlu0 %v841, 64
        %v848 = vpop.permute.xlu0 %847
        %849 = vrot.lane.b32.xlu0 %v842, 64
        %v850 = vpop.permute.xlu0 %849
        %v853 = vmul.f32 %v839, %v848
        %v854 = vmul.f32 %v840, %v850
        %857 = vrot.lane.b32.xlu0 %v853, 32
        %v858 = vpop.permute.xlu0 %857
        %859 = vrot.lane.b32.xlu0 %v854, 32
        %v860 = vpop.permute.xlu0 %859
        %v863 = vadd.f32 %v843, %v858
        %v864 = vadd.f32 %v844, %v860
        %v865 = vtanh.pop %v863
        %v866 = vtanh.pop %v864
        %869 = vrot.lane.b32.xlu0 %v865, 64
        %v870 = vpop.permute.xlu0 %869
        %871 = vrot.lane.b32.xlu0 %v866, 64
        %v872 = vpop.permute.xlu0 %871
        %v875 = vmul.f32 %v839, %v870
        %v876 = vmul.f32 %v840, %v872
        %879 = vrot.lane.b32.xlu0 %v875, 32
        %v880 = vpop.permute.xlu0 %879
        %881 = vrot.lane.b32.xlu0 %v876, 32
        %v882 = vpop.permute.xlu0 %881
        %885 = vst.msk [vmem:[%s175 + $0x4] sm:$0x1] %vm331, %v880
        %886 = vst.msk [vmem:[%s175 + $0xc] sm:$0x1] %vm331, %v882
        %v887 = vld [vmem:[%s151 + $0x5] sm:$0x1]
        %v888 = vld [vmem:[%s151 + $0xd] sm:$0x1]
        %v889 = vrot.slane %v876, 7
        %v890 = vsel %vm337, %v889, %v875
        %891 = vrot.lane.b32.xlu0 %v890, 32
        %v892 = vpop.permute.xlu0 %891
        %v893 = vsel %vm191, %v892, 0
        %895 = vmatprep.subr.mxu0 0.0
        %896 = vmatpush1.msra.mxu0 %v183
        %897 = vmatprep.subr.mxu0 0.0
        %898 = vmatpush1.msra.mxu0 %v184
        %899 = vmatprep.subr.mxu0 0.0
        %900 = vmatpush1.msra.mxu0 %v185
        %901 = vmatprep.subr.mxu0 0.0
        %902 = vmatpush1.msra.mxu0 %v186
        %903 = vmatprep.subr.mxu0 0.0
        %904 = vmatpush1.msra.mxu0 0.0
        %905 = vmatprep.subr.mxu0 0.0
        %906 = vmatpush1.msra.mxu0 0.0
        %907 = vmatprep.subr.mxu0 0.0
        %908 = vmatpush1.msra.mxu0 0.0
        %909 = vmatprep.subr.mxu0 0.0
        %910 = vmatpush1.msra.mxu0 0.0
        %911 = vmatprep.subr.mxu0 0.0
        %912 = vmatpush1.msra.mxu0 0.0
        %913 = vmatprep.subr.mxu0 0.0
        %914 = vmatpush1.msra.mxu0 0.0
        %915 = vmatprep.subr.mxu0 0.0
        %916 = vmatpush1.msra.mxu0 0.0
        %917 = vmatprep.subr.mxu0 0.0
        %918 = vmatpush1.msra.mxu0 0.0
        %919 = vmatprep.subr.mxu0 0.0
        %920 = vmatpush1.msra.mxu0 0.0
        %921 = vmatprep.subr.mxu0 0.0
        %922 = vmatpush1.msra.mxu0 0.0
        %923 = vmatprep.subr.mxu0 0.0
        %924 = vmatpush1.msra.mxu0 0.0
        %925 = vmatprep.subr.mxu0 0.0
        %926 = vmatpush1.msra.mxu0 0.0
        %927 = vmatprep.subr.mxu0 0.0
        %928 = vmatpush1.msra.mxu0 0.0
        %929 = vmatprep.subr.mxu0 0.0
        %930 = vmatpush1.msra.mxu0 0.0
        %931 = vmatprep.subr.mxu0 0.0
        %932 = vmatpush1.msra.mxu0 0.0
        %933 = vmatprep.subr.mxu0 0.0
        %934 = vmatpush1.msra.mxu0 0.0
        %935 = vmatprep.subr.mxu0 0.0
        %936 = vmatpush1.msra.mxu0 0.0
        %937 = vmatprep.subr.mxu0 0.0
        %938 = vmatpush1.msra.mxu0 0.0
        %939 = vmatprep.subr.mxu0 0.0
        %940 = vmatpush1.msra.mxu0 0.0
        %941 = vmatprep.subr.mxu0 0.0
        %942 = vmatpush1.msra.mxu0 0.0
        %943 = vmatprep.subr.mxu0 0.0
        %944 = vmatpush1.msra.mxu0 0.0
        %945 = vmatprep.subr.mxu0 0.0
        %946 = vmatpush1.msra.mxu0 0.0
        %947 = vmatprep.subr.mxu0 0.0
        %948 = vmatpush1.msra.mxu0 0.0
        %949 = vmatprep.subr.mxu0 0.0
        %950 = vmatpush1.msra.mxu0 0.0
        %951 = vmatprep.subr.mxu0 0.0
        %952 = vmatpush1.msra.mxu0 0.0
        %953 = vmatprep.subr.mxu0 0.0
        %954 = vmatpush1.msra.mxu0 0.0
        %955 = vmatprep.subr.mxu0 0.0
        %956 = vmatpush1.msra.mxu0 0.0
        %957 = vmatprep.subr.mxu0 0.0
        %958 = vmatpush1.msra.mxu0 0.0
        %959 = vmatprep.mubr.f32.mxu0 0.0
        %960 = vmatmul.mubr.f32.gmra.mrb[0].mxu0 %v893
        %v961 = vpop.f32.mrb[0].mxu0
        %v962 = vadd.f32 0.0, %v961
        %v963 = vpop.f32.mrb[0].mxu0
        %964 = vdwg.mxu0
        %v966 = vrot.slane %v962, 1
        %v969 = vadd.f32 %v887, %v962
        %v970 = vadd.f32 %v888, %v966
        %v971 = vmul.f32 %v969, 0.5
        %v972 = vmul.f32 %v970, 0.5
        %v973 = vtanh.pop %v971
        %v974 = vtanh.pop %v972
        %v975 = vmul.f32 %v973, 0.5
        %v976 = vmul.f32 %v974, 0.5
        %v977 = vadd.f32 %v975, 0.5
        %v978 = vadd.f32 %v976, 0.5
        %v979 = vtanh.pop %v969
        %v980 = vtanh.pop %v970
        %v981 = vmul.f32 %v977, %v863
        %v982 = vmul.f32 %v978, %v864
        %985 = vrot.lane.b32.xlu0 %v979, 64
        %v986 = vpop.permute.xlu0 %985
        %987 = vrot.lane.b32.xlu0 %v980, 64
        %v988 = vpop.permute.xlu0 %987
        %v991 = vmul.f32 %v977, %v986
        %v992 = vmul.f32 %v978, %v988
        %995 = vrot.lane.b32.xlu0 %v991, 32
        %v996 = vpop.permute.xlu0 %995
        %997 = vrot.lane.b32.xlu0 %v992, 32
        %v998 = vpop.permute.xlu0 %997
        %v1001 = vadd.f32 %v981, %v996
        %v1002 = vadd.f32 %v982, %v998
        %v1003 = vtanh.pop %v1001
        %v1004 = vtanh.pop %v1002
        %1007 = vrot.lane.b32.xlu0 %v1003, 64
        %v1008 = vpop.permute.xlu0 %1007
        %1009 = vrot.lane.b32.xlu0 %v1004, 64
        %v1010 = vpop.permute.xlu0 %1009
        %v1013 = vmul.f32 %v977, %v1008
        %v1014 = vmul.f32 %v978, %v1010
        %1017 = vrot.lane.b32.xlu0 %v1013, 32
        %v1018 = vpop.permute.xlu0 %1017
        %1019 = vrot.lane.b32.xlu0 %v1014, 32
        %v1020 = vpop.permute.xlu0 %1019
        %1023 = vst.msk [vmem:[%s175 + $0x5] sm:$0x1] %vm331, %v1018
        %1024 = vst.msk [vmem:[%s175 + $0xd] sm:$0x1] %vm331, %v1020
        %v1025 = vld [vmem:[%s151 + $0x6] sm:$0x1]
        %v1026 = vld [vmem:[%s151 + $0xe] sm:$0x1]
        %v1027 = vrot.slane %v1014, 7
        %v1028 = vsel %vm337, %v1027, %v1013
        %1029 = vrot.lane.b32.xlu0 %v1028, 32
        %v1030 = vpop.permute.xlu0 %1029
        %v1031 = vsel %vm191, %v1030, 0
        %1033 = vmatprep.subr.mxu0 0.0
        %1034 = vmatpush1.msra.mxu0 %v183
        %1035 = vmatprep.subr.mxu0 0.0
        %1036 = vmatpush1.msra.mxu0 %v184
        %1037 = vmatprep.subr.mxu0 0.0
        %1038 = vmatpush1.msra.mxu0 %v185
        %1039 = vmatprep.subr.mxu0 0.0
        %1040 = vmatpush1.msra.mxu0 %v186
        %1041 = vmatprep.subr.mxu0 0.0
        %1042 = vmatpush1.msra.mxu0 0.0
        %1043 = vmatprep.subr.mxu0 0.0
        %1044 = vmatpush1.msra.mxu0 0.0
        %1045 = vmatprep.subr.mxu0 0.0
        %1046 = vmatpush1.msra.mxu0 0.0
        %1047 = vmatprep.subr.mxu0 0.0
        %1048 = vmatpush1.msra.mxu0 0.0
        %1049 = vmatprep.subr.mxu0 0.0
        %1050 = vmatpush1.msra.mxu0 0.0
        %1051 = vmatprep.subr.mxu0 0.0
        %1052 = vmatpush1.msra.mxu0 0.0
        %1053 = vmatprep.subr.mxu0 0.0
        %1054 = vmatpush1.msra.mxu0 0.0
        %1055 = vmatprep.subr.mxu0 0.0
        %1056 = vmatpush1.msra.mxu0 0.0
        %1057 = vmatprep.subr.mxu0 0.0
        %1058 = vmatpush1.msra.mxu0 0.0
        %1059 = vmatprep.subr.mxu0 0.0
        %1060 = vmatpush1.msra.mxu0 0.0
        %1061 = vmatprep.subr.mxu0 0.0
        %1062 = vmatpush1.msra.mxu0 0.0
        %1063 = vmatprep.subr.mxu0 0.0
        %1064 = vmatpush1.msra.mxu0 0.0
        %1065 = vmatprep.subr.mxu0 0.0
        %1066 = vmatpush1.msra.mxu0 0.0
        %1067 = vmatprep.subr.mxu0 0.0
        %1068 = vmatpush1.msra.mxu0 0.0
        %1069 = vmatprep.subr.mxu0 0.0
        %1070 = vmatpush1.msra.mxu0 0.0
        %1071 = vmatprep.subr.mxu0 0.0
        %1072 = vmatpush1.msra.mxu0 0.0
        %1073 = vmatprep.subr.mxu0 0.0
        %1074 = vmatpush1.msra.mxu0 0.0
        %1075 = vmatprep.subr.mxu0 0.0
        %1076 = vmatpush1.msra.mxu0 0.0
        %1077 = vmatprep.subr.mxu0 0.0
        %1078 = vmatpush1.msra.mxu0 0.0
        %1079 = vmatprep.subr.mxu0 0.0
        %1080 = vmatpush1.msra.mxu0 0.0
        %1081 = vmatprep.subr.mxu0 0.0
        %1082 = vmatpush1.msra.mxu0 0.0
        %1083 = vmatprep.subr.mxu0 0.0
        %1084 = vmatpush1.msra.mxu0 0.0
        %1085 = vmatprep.subr.mxu0 0.0
        %1086 = vmatpush1.msra.mxu0 0.0
        %1087 = vmatprep.subr.mxu0 0.0
        %1088 = vmatpush1.msra.mxu0 0.0
        %1089 = vmatprep.subr.mxu0 0.0
        %1090 = vmatpush1.msra.mxu0 0.0
        %1091 = vmatprep.subr.mxu0 0.0
        %1092 = vmatpush1.msra.mxu0 0.0
        %1093 = vmatprep.subr.mxu0 0.0
        %1094 = vmatpush1.msra.mxu0 0.0
        %1095 = vmatprep.subr.mxu0 0.0
        %1096 = vmatpush1.msra.mxu0 0.0
        %1097 = vmatprep.mubr.f32.mxu0 0.0
        %1098 = vmatmul.mubr.f32.gmra.mrb[0].mxu0 %v1031
        %v1099 = vpop.f32.mrb[0].mxu0
        %v1100 = vadd.f32 0.0, %v1099
        %v1101 = vpop.f32.mrb[0].mxu0
        %1102 = vdwg.mxu0
        %v1104 = vrot.slane %v1100, 1
        %v1107 = vadd.f32 %v1025, %v1100
        %v1108 = vadd.f32 %v1026, %v1104
        %v1109 = vmul.f32 %v1107, 0.5
        %v1110 = vmul.f32 %v1108, 0.5
        %v1111 = vtanh.pop %v1109
        %v1112 = vtanh.pop %v1110
        %v1113 = vmul.f32 %v1111, 0.5
        %v1114 = vmul.f32 %v1112, 0.5
        %v1115 = vadd.f32 %v1113, 0.5
        %v1116 = vadd.f32 %v1114, 0.5
        %v1117 = vtanh.pop %v1107
        %v1118 = vtanh.pop %v1108
        %v1119 = vmul.f32 %v1115, %v1001
        %v1120 = vmul.f32 %v1116, %v1002
        %1123 = vrot.lane.b32.xlu0 %v1117, 64
        %v1124 = vpop.permute.xlu0 %1123
        %1125 = vrot.lane.b32.xlu0 %v1118, 64
        %v1126 = vpop.permute.xlu0 %1125
        %v1129 = vmul.f32 %v1115, %v1124
        %v1130 = vmul.f32 %v1116, %v1126
        %1133 = vrot.lane.b32.xlu0 %v1129, 32
        %v1134 = vpop.permute.xlu0 %1133
        %1135 = vrot.lane.b32.xlu0 %v1130, 32
        %v1136 = vpop.permute.xlu0 %1135
        %v1139 = vadd.f32 %v1119, %v1134
        %v1140 = vadd.f32 %v1120, %v1136
        %v1141 = vtanh.pop %v1139
        %v1142 = vtanh.pop %v1140
        %1145 = vrot.lane.b32.xlu0 %v1141, 64
        %v1146 = vpop.permute.xlu0 %1145
        %1147 = vrot.lane.b32.xlu0 %v1142, 64
        %v1148 = vpop.permute.xlu0 %1147
        %v1151 = vmul.f32 %v1115, %v1146
        %v1152 = vmul.f32 %v1116, %v1148
        %1155 = vrot.lane.b32.xlu0 %v1151, 32
        %v1156 = vpop.permute.xlu0 %1155
        %1157 = vrot.lane.b32.xlu0 %v1152, 32
        %v1158 = vpop.permute.xlu0 %1157
        %1161 = vst.msk [vmem:[%s175 + $0x6] sm:$0x1] %vm331, %v1156
        %1162 = vst.msk [vmem:[%s175 + $0xe] sm:$0x1] %vm331, %v1158
        %v1163 = vld [vmem:[%s151 + $0x7] sm:$0x1]
        %v1164 = vld [vmem:[%s151 + $0xf] sm:$0x1]
        %v1165 = vrot.slane %v1152, 7
        %v1166 = vsel %vm337, %v1165, %v1151
        %1167 = vrot.lane.b32.xlu0 %v1166, 32
        %v1168 = vpop.permute.xlu0 %1167
        %v1169 = vsel %vm191, %v1168, 0
        %1171 = vmatprep.subr.mxu0 0.0
        %1172 = vmatpush1.msra.mxu0 %v183
        %1173 = vmatprep.subr.mxu0 0.0
        %1174 = vmatpush1.msra.mxu0 %v184
        %1175 = vmatprep.subr.mxu0 0.0
        %1176 = vmatpush1.msra.mxu0 %v185
        %1177 = vmatprep.subr.mxu0 0.0
        %1178 = vmatpush1.msra.mxu0 %v186
        %1179 = vmatprep.subr.mxu0 0.0
        %1180 = vmatpush1.msra.mxu0 0.0
        %1181 = vmatprep.subr.mxu0 0.0
        %1182 = vmatpush1.msra.mxu0 0.0
        %1183 = vmatprep.subr.mxu0 0.0
        %1184 = vmatpush1.msra.mxu0 0.0
        %1185 = vmatprep.subr.mxu0 0.0
        %1186 = vmatpush1.msra.mxu0 0.0
        %1187 = vmatprep.subr.mxu0 0.0
        %1188 = vmatpush1.msra.mxu0 0.0
        %1189 = vmatprep.subr.mxu0 0.0
        %1190 = vmatpush1.msra.mxu0 0.0
        %1191 = vmatprep.subr.mxu0 0.0
        %1192 = vmatpush1.msra.mxu0 0.0
        %1193 = vmatprep.subr.mxu0 0.0
        %1194 = vmatpush1.msra.mxu0 0.0
        %1195 = vmatprep.subr.mxu0 0.0
        %1196 = vmatpush1.msra.mxu0 0.0
        %1197 = vmatprep.subr.mxu0 0.0
        %1198 = vmatpush1.msra.mxu0 0.0
        %1199 = vmatprep.subr.mxu0 0.0
        %1200 = vmatpush1.msra.mxu0 0.0
        %1201 = vmatprep.subr.mxu0 0.0
        %1202 = vmatpush1.msra.mxu0 0.0
        %1203 = vmatprep.subr.mxu0 0.0
        %1204 = vmatpush1.msra.mxu0 0.0
        %1205 = vmatprep.subr.mxu0 0.0
        %1206 = vmatpush1.msra.mxu0 0.0
        %1207 = vmatprep.subr.mxu0 0.0
        %1208 = vmatpush1.msra.mxu0 0.0
        %1209 = vmatprep.subr.mxu0 0.0
        %1210 = vmatpush1.msra.mxu0 0.0
        %1211 = vmatprep.subr.mxu0 0.0
        %1212 = vmatpush1.msra.mxu0 0.0
        %1213 = vmatprep.subr.mxu0 0.0
        %1214 = vmatpush1.msra.mxu0 0.0
        %1215 = vmatprep.subr.mxu0 0.0
        %1216 = vmatpush1.msra.mxu0 0.0
        %1217 = vmatprep.subr.mxu0 0.0
        %1218 = vmatpush1.msra.mxu0 0.0
        %1219 = vmatprep.subr.mxu0 0.0
        %1220 = vmatpush1.msra.mxu0 0.0
        %1221 = vmatprep.subr.mxu0 0.0
        %1222 = vmatpush1.msra.mxu0 0.0
        %1223 = vmatprep.subr.mxu0 0.0
        %1224 = vmatpush1.msra.mxu0 0.0
        %1225 = vmatprep.subr.mxu0 0.0
        %1226 = vmatpush1.msra.mxu0 0.0
        %1227 = vmatprep.subr.mxu0 0.0
        %1228 = vmatpush1.msra.mxu0 0.0
        %1229 = vmatprep.subr.mxu0 0.0
        %1230 = vmatpush1.msra.mxu0 0.0
        %1231 = vmatprep.subr.mxu0 0.0
        %1232 = vmatpush1.msra.mxu0 0.0
        %1233 = vmatprep.subr.mxu0 0.0
        %1234 = vmatpush1.msra.mxu0 0.0
        %1235 = vmatprep.mubr.f32.mxu0 0.0
        %1236 = vmatmul.mubr.f32.gmra.mrb[0].mxu0 %v1169
        %v1237 = vpop.f32.mrb[0].mxu0
        %v1238 = vadd.f32 0.0, %v1237
        %v1239 = vpop.f32.mrb[0].mxu0
        %1240 = vdwg.mxu0
        %v1242 = vrot.slane %v1238, 1
        %v1245 = vadd.f32 %v1163, %v1238
        %v1246 = vadd.f32 %v1164, %v1242
        %v1247 = vmul.f32 %v1245, 0.5
        %v1248 = vmul.f32 %v1246, 0.5
        %v1249 = vtanh.pop %v1247
        %v1250 = vtanh.pop %v1248
        %v1251 = vmul.f32 %v1249, 0.5
        %v1252 = vmul.f32 %v1250, 0.5
        %v1253 = vadd.f32 %v1251, 0.5
        %v1254 = vadd.f32 %v1252, 0.5
        %v1255 = vtanh.pop %v1245
        %v1256 = vtanh.pop %v1246
        %v1257 = vmul.f32 %v1253, %v1139
        %v1258 = vmul.f32 %v1254, %v1140
        %1261 = vrot.lane.b32.xlu0 %v1255, 64
        %v1262 = vpop.permute.xlu0 %1261
        %1263 = vrot.lane.b32.xlu0 %v1256, 64
        %v1264 = vpop.permute.xlu0 %1263
        %v1267 = vmul.f32 %v1253, %v1262
        %v1268 = vmul.f32 %v1254, %v1264
        %1271 = vrot.lane.b32.xlu0 %v1267, 32
        %v1272 = vpop.permute.xlu0 %1271
        %1273 = vrot.lane.b32.xlu0 %v1268, 32
        %v1274 = vpop.permute.xlu0 %1273
        %v1277 = vadd.f32 %v1257, %v1272
        %v1278 = vadd.f32 %v1258, %v1274
        %v1279 = vtanh.pop %v1277
        %v1280 = vtanh.pop %v1278
        %1283 = vrot.lane.b32.xlu0 %v1279, 64
        %v1284 = vpop.permute.xlu0 %1283
        %1285 = vrot.lane.b32.xlu0 %v1280, 64
        %v1286 = vpop.permute.xlu0 %1285
        %v1289 = vmul.f32 %v1253, %v1284
        %v1290 = vmul.f32 %v1254, %v1286
        %1293 = vrot.lane.b32.xlu0 %v1289, 32
        %v1294 = vpop.permute.xlu0 %1293
        %1295 = vrot.lane.b32.xlu0 %v1290, 32
        %v1296 = vpop.permute.xlu0 %1295
        %1299 = vst.msk [vmem:[%s175 + $0x7] sm:$0x1] %vm331, %v1294
        %1300 = vst.msk [vmem:[%s175 + $0xf] sm:$0x1] %vm331, %v1296
        %v1301 = vrot.slane %v1290, 7
        %v1302 = vsel %vm337, %v1301, %v1289
        %1303 = vrot.lane.b32.xlu0 %v1302, 32
        %v1304 = vpop.permute.xlu0 %1303
        %vm1306 = vcmask 254976
        %1307 = vst.msk [vmem:[#allocation2] sm:$0x3] %vm1306, %v1304
        %v1310 = vrot.slane %v1278, 7
        %v1311 = vsel %vm337, %v1310, %v1277
        %1312 = vrot.lane.b32.xlu0 %v1311, 96
        %v1313 = vpop.permute.xlu0 %1312
        %1315 = vst.msk [vmem:[#allocation3] sm:$0x3] %vm1306, %v1313
        %s1316 = sand.u32 %s75, 1
        %s1317 = scalar_lea.sflag [#allocation6], %s1316
        %s1318 = sand.u32 %s75, 1
        %s1319 = smul.addr %s1318, 16
        %s1320 = scalar_lea.vmem [#allocation9], %s1319
        // Predicated region
        $region41: #{tpu_custom_call.1} parent=27 // pred_check
          %p1321 = pneg %p85
        $region42: #{tpu_custom_call.1} parent=27 // pred_check_branch
          %1323 = sbr.rel (%p1321) target = $region44
        $region43: #{tpu_custom_call.1} parent=27 // pred_region
          %s1325 = ssub.s32 256, 256
          %1326 = vsyncadd %s1317, %s1325
          %s1327 = smul.addr %s20, 128
          %s1328 = scalar_lea.hbm %s2, %s1327
          %s1329 = sshll.u32 %s1320, 4
          %s1330 = int_to_ptr.vmem [resolvable:$true] %s1329
          %1335 = dma.vmem_to_hbm [thread:$0]  %s1330, 256, %s1328, %s1317, 128, 256, 8
        $region44: #{tpu_custom_call.1} parent=27 // pred_fallthru
          _
      $region28: #{tpu_custom_call.1} parent=5 // pred_fallthru
        _
      %p1336 = scmp.le.s32.totalorder 2, %s15
      // Predicated region
      $region45: #{tpu_custom_call.1} parent=5 // pred_check
        %p1337 = pneg %p1336
      $region46: #{tpu_custom_call.1} parent=5 // pred_check_branch
        %1339 = sbr.rel (%p1337) target = $region48
      $region47: #{tpu_custom_call.1} parent=5 // pred_region
        %s1340 = ssub.s32 %s15, 2
        // Predicated region
        $region49: #{tpu_custom_call.1} parent=47 // pred_check
          %p1341 = pneg %p91
        $region50: #{tpu_custom_call.1} parent=47 // pred_check_branch
          %1343 = sbr.rel (%p1341) target = $region52
        $region51: #{tpu_custom_call.1} parent=47 // pred_region
          %s1344 = sand.u32 %s76, 1
          %s1345 = scalar_lea.sflag [#allocation6], %s1344
          %s1346 = sand.u32 %s76, 1
          %s1347 = smul.addr %s1346, 16
          %s1348 = scalar_lea.vmem [#allocation9], %s1347
          %1349 = dma.done %s1345, 256
        $region52: #{tpu_custom_call.1} parent=47 // pred_fallthru
          _
      $region48: #{tpu_custom_call.1} parent=5 // pred_fallthru
        _
    $region6: #{tpu_custom_call.1} parent=1 // loop_footer
      %s19 = sadd.s32 1, %s15
    $region7: #{tpu_custom_call.1} parent=1 // loop_footer_branch
      %14 = sbr.rel target = $region3
    $region8: #{tpu_custom_call.1} parent=1 // loop_exit
      _
    %1350 = vsyncpa [#allocation5], 1
    %s1351 = scalar_lea.sflag [#allocation5], 1
    %1352 = vsyncpa %s1351, 1
    %1353 = vsyncpa [#allocation8], 1
    %1354 = vsyncpa [#allocation6], 1
    %s1355 = scalar_lea.sflag [#allocation6], 1
    %1356 = vsyncpa %s1355, 1

</llo_original>
